<compile_context>
chip_gen: v7x
topology: tpu7x:2x2x1
jax: 0.10.0
libtpu: 0.0.40
codegen_flags: <defaults>
</compile_context>

<pallas_src>
import math
import functools

import jax
import jax.numpy as jnp
from jax.experimental import pallas as pl
from jax.experimental.pallas import tpu as pltpu

EPS = 1e-6


def _layer_norm(x, alpha, bias, d):
    # PyTorch Norm: alpha * (x - mean) / (x.std(dim=-1, unbiased=True) + eps) + bias
    mean = jnp.mean(x, axis=-1, keepdims=True)
    c = x - mean
    var = jnp.sum(c * c, axis=-1, keepdims=True) * (1.0 / (d - 1))
    return alpha * c / (jnp.sqrt(var) + EPS) + bias          # exact divide (parity)


def encoder_stack_kernel(x_ref, maskb_ref,
                         n1a_ref, n1b_ref,
                         wqkv_ref, bqkv_ref,
                         wo_ref, bo_ref,
                         n2a_ref, n2b_ref,
                         w1_ref, b1_ref, w2_ref, b2_ref,
                         fna_ref, fnb_ref,
                         o_ref,
                         xc_ref,
                         *, batch, seq, d_model, heads, n_layers):
    """One EncoderLayer per grid step (layer axis = grid axis 0) + fused final Norm."""
    dk = d_model // heads
    scale = 1.0 / math.sqrt(dk)
    M = batch * seq
    bf16 = jnp.bfloat16
    layer = pl.program_id(0)

    # Initialize the carried activation slab from the input on the first layer step.
    @pl.when(layer == 0)
    def _():
        xc_ref[...] = x_ref[...]

    x = xc_ref[...]                                  # (M, D) f32, carried across layers
    mask_bias = maskb_ref[...]                       # (B, 1, S) additive bias (host-made)

    # --- self-attention sublayer: x = x + attn(norm_1(x)) ---
    x2 = _layer_norm(x, n1a_ref[...], n1b_ref[...], d_model).astype(bf16)
    qkv = jnp.dot(x2, wqkv_ref[...],
                  preferred_element_type=jnp.float32) + bqkv_ref[...]      # (M, 3D)
    qkv = qkv.reshape(batch, seq, 3 * d_model)                             # aligned regroup
    q = qkv[:, :, 0:d_model].astype(bf16)
    k = qkv[:, :, d_model:2 * d_model].astype(bf16)
    v = qkv[:, :, 2 * d_model:3 * d_model].astype(bf16)

    # Per-head scores stacked on a new leading axis -> ONE softmax over all heads.
    scores = jnp.stack(
        [jnp.einsum('bqd,bkd->bqk',
                    q[:, :, h * dk:(h + 1) * dk], k[:, :, h * dk:(h + 1) * dk],
                    preferred_element_type=jnp.float32)
         for h in range(heads)], axis=0) * scale                          # (H, B, S, S)
    scores = scores + mask_bias                      # masked_fill(mask==0, -1e9)
    scores = scores - jnp.max(scores, axis=-1, keepdims=True)
    p = jnp.exp(scores)
    p = p * pl.reciprocal(jnp.sum(p, axis=-1, keepdims=True), approx=True)
    p = p.astype(bf16)                               # attention dropout = identity

    # concat(head_outs) @ Wo  ==  sum_h head_out_h @ Wo[h*dk:(h+1)*dk, :]  (no concat)
    wo = wo_ref[...]
    attn = bo_ref[...]
    for h in range(heads):
        head_out = jnp.einsum('bqk,bkd->bqd', p[h], v[:, :, h * dk:(h + 1) * dk],
                              preferred_element_type=jnp.float32)         # (B, S, dk)
        attn = attn + jnp.dot(head_out.reshape(M, dk).astype(bf16),
                              wo[h * dk:(h + 1) * dk, :],
                              preferred_element_type=jnp.float32)
    x = x + attn

    # --- feed-forward sublayer: x = x + ff(norm_2(x)) ---
    x2 = _layer_norm(x, n2a_ref[...], n2b_ref[...], d_model).astype(bf16)
    h1 = jnp.maximum(
        jnp.dot(x2, w1_ref[...], preferred_element_type=jnp.float32) + b1_ref[...], 0.0)
    ff = jnp.dot(h1.astype(bf16), w2_ref[...],
                 preferred_element_type=jnp.float32) + b2_ref[...]
    x = x + ff

    xc_ref[...] = x                                  # carry to next layer step

    # Final Norm(d_model), fused; output written once (single lane-contiguous store).
    @pl.when(layer == n_layers - 1)
    def _():
        o_ref[...] = _layer_norm(x, fna_ref[...], fnb_ref[...], d_model).astype(o_ref.dtype)


def run_encoder_stack(x, mask, p, *, heads, n_layers):
    B, S, D = x.shape
    assert n_layers >= 1
    M = B * S
    DFF = p["w1"].shape[-1]

    x_flat = x.reshape(M, D).astype(jnp.float32)
    # Additive mask bias precomputed on host (pure setup work, never changes per call).
    mask_bias = jnp.where(mask == 0.0, -1e9, 0.0).astype(jnp.float32)     # (B, 1, S)

    kern = functools.partial(encoder_stack_kernel, batch=B, seq=S, d_model=D,
                             heads=heads, n_layers=n_layers)

    def wspec(tail):  # stacked per-layer param (N, *tail): stream one layer per step
        return pl.BlockSpec((None,) + tail, lambda l: (l, 0, 0))

    full2d = lambda shp: pl.BlockSpec(shp, lambda l: tuple(0 for _ in shp))

    grid_spec = pltpu.PrefetchScalarGridSpec(
        num_scalar_prefetch=0,
        grid=(n_layers,),
        in_specs=[
            full2d((M, D)),                 # x (flattened activations, fetched once)
            full2d((B, 1, S)),              # additive mask bias
            wspec((1, D)), wspec((1, D)),               # norm_1 alpha / bias
            wspec((D, 3 * D)), wspec((1, 3 * D)),       # fused Wqkv / bqkv
            wspec((D, D)), wspec((1, D)),               # Wo / bo
            wspec((1, D)), wspec((1, D)),               # norm_2 alpha / bias
            wspec((D, DFF)), wspec((1, DFF)),           # W1 / b1
            wspec((DFF, D)), wspec((1, D)),             # W2 / b2
            full2d((1, D)), full2d((1, D)),             # final Norm alpha / bias
        ],
        out_specs=full2d((M, D)),
        scratch_shapes=[pltpu.VMEM((M, D), jnp.float32)],   # carried activation slab
    )

    # Per-step VMEM footprint = activation slab + 2x one layer's weights (Pallas
    # double-buffers the layer-indexed BlockSpecs) -- tiny here; at production sizes
    # re-derive and keep under v7x's 64 MiB physical VMEM.
    out_flat = pl.pallas_call(
        kern,
        out_shape=jax.ShapeDtypeStruct((M, D), jnp.float32),
        grid_spec=grid_spec,
        compiler_params=pltpu.CompilerParams(dimension_semantics=("arbitrary",)),
    )(x_flat, mask_bias,
      p["n1a"], p["n1b"],
      p["wqkv"], p["bqkv"],
      p["wo"], p["bo"],
      p["n2a"], p["n2b"],
      p["w1"], p["b1"], p["w2"], p["b2"],
      p["fna"], p["fnb"])
    return out_flat.reshape(B, S, D)


def init_params(key, d_model, d_ff, n_layers):
    ks = jax.random.split(key, 6)

    def w(k, shp):
        return jax.random.normal(k, shp, jnp.float32) * 0.02

    # One EncoderLayer's parameters.  get_clones deep-copies it, so every layer starts
    # from identical weights -> replicate along a leading [N] axis (distinct weights
    # work identically).  Weights are bf16 (MXU operands); biases / norm params f32.
    wq, wk, wv = w(ks[0], (d_model, d_model)), w(ks[1], (d_model, d_model)), w(ks[2], (d_model, d_model))
    one = {
        "n1a": jnp.ones((1, d_model), jnp.float32),
        "n1b": jnp.zeros((1, d_model), jnp.float32),
        "wqkv": jnp.concatenate([wq, wk, wv], axis=1).astype(jnp.bfloat16),  # fused QKV
        "bqkv": jnp.zeros((1, 3 * d_model), jnp.float32),
        "wo": w(ks[3], (d_model, d_model)).astype(jnp.bfloat16),
        "bo": jnp.zeros((1, d_model), jnp.float32),
        "n2a": jnp.ones((1, d_model), jnp.float32),
        "n2b": jnp.zeros((1, d_model), jnp.float32),
        "w1": w(ks[4], (d_model, d_ff)).astype(jnp.bfloat16),
        "b1": jnp.zeros((1, d_ff), jnp.float32),
        "w2": w(ks[5], (d_ff, d_model)).astype(jnp.bfloat16),
        "b2": jnp.zeros((1, d_model), jnp.float32),
    }
    params = {name: jnp.stack([val] * n_layers, axis=0) for name, val in one.items()}
    params["fna"] = jnp.ones((1, d_model), jnp.float32)    # final Norm alpha
    params["fnb"] = jnp.zeros((1, d_model), jnp.float32)   # final Norm bias
    return params


if __name__ == "__main__":
    # camemHiddenSize == d_model == 32, N=2 layers, 4 heads, d_ff=64.
    # S_cam=7 so that doDaille concat gives S_tot=8 and B*S_tot=16 (sublane-aligned).
    B, S_CAM, D, H, N, DFF = 2, 7, 32, 4, 2, 64
    do_daille = True

    key = jax.random.PRNGKey(0)
    k_cam, k_layer, k_emb, k_daille = jax.random.split(key, 4)

    # camemOut = camemModel(src)[1][-1]  (frozen CamemBERT last hidden state, [B, S, D]).
    # TODO(synk): the frozen CamemBERT forward has no clean Pallas equivalent; its
    # output is synthesized deterministically here and fed to the kernel as input.
    camem_out = jax.random.normal(k_cam, (B, S_CAM, D), jnp.float32)

    # Embedder(7, d_model) lookup for dailleVec (plain JAX glue), concat along seq dim.
    embed_table = jax.random.normal(k_emb, (7, D), jnp.float32) * 0.02
    daille_vec = jax.random.randint(k_daille, (B,), 0, 7)
    daille_emb = embed_table[daille_vec].reshape(B, 1, D)

    x = jnp.concatenate([camem_out, daille_emb], axis=1) if do_daille else camem_out
    S_tot = x.shape[1]

    # Key mask [B, 1, S_tot]; mask the last key position of batch 1 to exercise masking.
    mask = jnp.ones((B, 1, S_tot), jnp.float32)
    mask = mask.at[1, 0, S_tot - 1].set(0.0)

    params = init_params(k_layer, D, DFF, N)

    out = run_encoder_stack(x, mask, params, heads=H, n_layers=N)
    out = jax.block_until_ready(out)
    assert out.shape == (B, S_tot, D)
    print("KERNEL_OK")
</pallas_src>

<mosaic_0001>
module attributes {stable_mosaic.version = 11 : i64} {
  func.func @encoder_stack_kernel(%arg0: i32, %arg1: memref<16x32xf32, #tpu.memory_space<vmem>>, %arg2: memref<2x1x8xf32, #tpu.memory_space<vmem>>, %arg3: memref<1x1x32xf32, #tpu.memory_space<vmem>>, %arg4: memref<1x1x32xf32, #tpu.memory_space<vmem>>, %arg5: memref<1x32x96xbf16, #tpu.memory_space<vmem>>, %arg6: memref<1x1x96xf32, #tpu.memory_space<vmem>>, %arg7: memref<1x32x32xbf16, #tpu.memory_space<vmem>>, %arg8: memref<1x1x32xf32, #tpu.memory_space<vmem>>, %arg9: memref<1x1x32xf32, #tpu.memory_space<vmem>>, %arg10: memref<1x1x32xf32, #tpu.memory_space<vmem>>, %arg11: memref<1x32x64xbf16, #tpu.memory_space<vmem>>, %arg12: memref<1x1x64xf32, #tpu.memory_space<vmem>>, %arg13: memref<1x64x32xbf16, #tpu.memory_space<vmem>>, %arg14: memref<1x1x32xf32, #tpu.memory_space<vmem>>, %arg15: memref<1x32xf32, #tpu.memory_space<vmem>>, %arg16: memref<1x32xf32, #tpu.memory_space<vmem>>, %arg17: memref<16x32xf32, #tpu.memory_space<vmem>>, %arg18: memref<16x32xf32, #tpu.memory_space<vmem>>) attributes {dimension_semantics = [#tpu.dimension_semantics<arbitrary>], iteration_bounds = array<i64: 2>, scalar_prefetch = 0 : i64, scratch_operands = 1 : i64, tpu.core_type = #tpu.core_type<tc>, window_params = [{pipeline_mode = #tpu.pipeline_mode<synchronous>, transform_indices = @transform_0, window_bounds = array<i64: 16, 32>}, {pipeline_mode = #tpu.pipeline_mode<synchronous>, transform_indices = @transform_1, window_bounds = array<i64: 2, 1, 8>}, {transform_indices = @transform_2, window_bounds = array<i64: 1, 1, 32>}, {transform_indices = @transform_3, window_bounds = array<i64: 1, 1, 32>}, {transform_indices = @transform_4, window_bounds = array<i64: 1, 32, 96>}, {transform_indices = @transform_5, window_bounds = array<i64: 1, 1, 96>}, {transform_indices = @transform_6, window_bounds = array<i64: 1, 32, 32>}, {transform_indices = @transform_7, window_bounds = array<i64: 1, 1, 32>}, {transform_indices = @transform_8, window_bounds = array<i64: 1, 1, 32>}, {transform_indices = @transform_9, window_bounds = array<i64: 1, 1, 32>}, {transform_indices = @transform_10, window_bounds = array<i64: 1, 32, 64>}, {transform_indices = @transform_11, window_bounds = array<i64: 1, 1, 64>}, {transform_indices = @transform_12, window_bounds = array<i64: 1, 64, 32>}, {transform_indices = @transform_13, window_bounds = array<i64: 1, 1, 32>}, {pipeline_mode = #tpu.pipeline_mode<synchronous>, transform_indices = @transform_14, window_bounds = array<i64: 1, 32>}, {pipeline_mode = #tpu.pipeline_mode<synchronous>, transform_indices = @transform_15, window_bounds = array<i64: 1, 32>}, {pipeline_mode = #tpu.pipeline_mode<synchronous>, transform_indices = @transform_16, window_bounds = array<i64: 16, 32>}]} {
    %c0_i32 = arith.constant 0 : i32
    %0 = arith.cmpi eq, %arg0, %c0_i32 : i32
    %1 = arith.extui %0 : i1 to i32
    %c0_i32_0 = arith.constant 0 : i32
    %2 = arith.cmpi ne, %1, %c0_i32_0 : i32
    scf.if %2 {
      %c0_72 = arith.constant 0 : index
      %c0_73 = arith.constant 0 : index
      %166 = vector.load %arg1[%c0_72, %c0_73] : memref<16x32xf32, #tpu.memory_space<vmem>>, vector<16x32xf32>
      %c0_74 = arith.constant 0 : index
      %c0_75 = arith.constant 0 : index
      %167 = vector.load %arg18[%c0_74, %c0_75] : memref<16x32xf32, #tpu.memory_space<vmem>>, vector<16x32xf32>
      tpu.vector_store %arg18[%c0_74, %c0_75], %166 {strides = array<i32>} : memref<16x32xf32, #tpu.memory_space<vmem>>, vector<16x32xf32>,
    } else {
    }
    %c0 = arith.constant 0 : index
    %c0_1 = arith.constant 0 : index
    %3 = vector.load %arg18[%c0, %c0_1] : memref<16x32xf32, #tpu.memory_space<vmem>>, vector<16x32xf32>
    %c0_2 = arith.constant 0 : index
    %c0_3 = arith.constant 0 : index
    %c0_4 = arith.constant 0 : index
    %4 = vector.load %arg2[%c0_2, %c0_3, %c0_4] : memref<2x1x8xf32, #tpu.memory_space<vmem>>, vector<2x1x8xf32>
    %c0_5 = arith.constant 0 : index
    %c0_6 = arith.constant 0 : index
    %c0_7 = arith.constant 0 : index
    %5 = vector.load %arg3[%c0_5, %c0_6, %c0_7] : memref<1x1x32xf32, #tpu.memory_space<vmem>>, vector<1x1x32xf32>
    %6 = vector.shape_cast %5 : vector<1x1x32xf32> to vector<1x32xf32>
    %c0_8 = arith.constant 0 : index
    %c0_9 = arith.constant 0 : index
    %c0_10 = arith.constant 0 : index
    %7 = vector.load %arg4[%c0_8, %c0_9, %c0_10] : memref<1x1x32xf32, #tpu.memory_space<vmem>>, vector<1x1x32xf32>
    %8 = vector.shape_cast %7 : vector<1x1x32xf32> to vector<1x32xf32>
    %cst = arith.constant dense<0.000000e+00> : vector<16xf32>
    %9 = vector.multi_reduction <add>, %3, %cst [1] : vector<16x32xf32> to vector<16xf32>
    %10 = vector.shape_cast %9 : vector<16xf32> to vector<16x1xf32>
    %cst_11 = arith.constant 3.200000e+01 : f32
    %11 = vector.broadcast %cst_11 : f32 to vector<16x1xf32>
    %12 = arith.divf %10, %11 : vector<16x1xf32>
    %13 = vector.broadcast %12 : vector<16x1xf32> to vector<16x32xf32>
    %14 = arith.subf %3, %13 : vector<16x32xf32>
    %15 = arith.mulf %14, %14 : vector<16x32xf32>
    %cst_12 = arith.constant dense<0.000000e+00> : vector<16xf32>
    %16 = vector.multi_reduction <add>, %15, %cst_12 [1] : vector<16x32xf32> to vector<16xf32>
    %17 = vector.shape_cast %16 : vector<16xf32> to vector<16x1xf32>
    %cst_13 = arith.constant 0.0322580636 : f32
    %18 = vector.broadcast %cst_13 : f32 to vector<16x1xf32>
    %19 = arith.mulf %17, %18 : vector<16x1xf32>
    %20 = vector.broadcast %6 : vector<1x32xf32> to vector<16x32xf32>
    %21 = arith.mulf %20, %14 : vector<16x32xf32>
    %22 = math.sqrt %19 : vector<16x1xf32>
    %cst_14 = arith.constant 9.99999997E-7 : f32
    %23 = vector.broadcast %cst_14 : f32 to vector<16x1xf32>
    %24 = arith.addf %22, %23 : vector<16x1xf32>
    %25 = vector.broadcast %24 : vector<16x1xf32> to vector<16x32xf32>
    %26 = arith.divf %21, %25 : vector<16x32xf32>
    %27 = vector.broadcast %8 : vector<1x32xf32> to vector<16x32xf32>
    %28 = arith.addf %26, %27 : vector<16x32xf32>
    %29 = arith.truncf %28 : vector<16x32xf32> to vector<16x32xbf16>
    %c0_15 = arith.constant 0 : index
    %c0_16 = arith.constant 0 : index
    %c0_17 = arith.constant 0 : index
    %30 = vector.load %arg5[%c0_15, %c0_16, %c0_17] : memref<1x32x96xbf16, #tpu.memory_space<vmem>>, vector<1x32x96xbf16>
    %31 = vector.shape_cast %30 : vector<1x32x96xbf16> to vector<32x96xbf16>
    %cst_18 = arith.constant dense<0.000000e+00> : vector<16x96xf32>
    %32 = tpu.matmul %29, %31, %cst_18 {dimension_numbers = #tpu.dot_dimension_numbers<[1], [0], [0], [1], [0, 0, 1, 1], [], []>} : vector<16x32xbf16>, vector<32x96xbf16>, vector<16x96xf32> -> vector<16x96xf32>
    %c0_19 = arith.constant 0 : index
    %c0_20 = arith.constant 0 : index
    %c0_21 = arith.constant 0 : index
    %33 = vector.load %arg6[%c0_19, %c0_20, %c0_21] : memref<1x1x96xf32, #tpu.memory_space<vmem>>, vector<1x1x96xf32>
    %34 = vector.shape_cast %33 : vector<1x1x96xf32> to vector<1x96xf32>
    %35 = vector.broadcast %34 : vector<1x96xf32> to vector<16x96xf32>
    %36 = arith.addf %32, %35 : vector<16x96xf32>
    %37 = vector.shape_cast %36 : vector<16x96xf32> to vector<2x8x96xf32>
    %38 = vector.extract_strided_slice %37 {offsets = [0, 0, 0], sizes = [2, 8, 32], strides = [1, 1, 1]} : vector<2x8x96xf32> to vector<2x8x32xf32>
    %39 = arith.truncf %38 : vector<2x8x32xf32> to vector<2x8x32xbf16>
    %40 = vector.extract_strided_slice %37 {offsets = [0, 0, 32], sizes = [2, 8, 32], strides = [1, 1, 1]} : vector<2x8x96xf32> to vector<2x8x32xf32>
    %41 = arith.truncf %40 : vector<2x8x32xf32> to vector<2x8x32xbf16>
    %42 = vector.extract_strided_slice %37 {offsets = [0, 0, 64], sizes = [2, 8, 32], strides = [1, 1, 1]} : vector<2x8x96xf32> to vector<2x8x32xf32>
    %43 = arith.truncf %42 : vector<2x8x32xf32> to vector<2x8x32xbf16>
    %44 = vector.extract_strided_slice %39 {offsets = [0, 0, 0], sizes = [2, 8, 8], strides = [1, 1, 1]} : vector<2x8x32xbf16> to vector<2x8x8xbf16>
    %45 = vector.extract_strided_slice %41 {offsets = [0, 0, 0], sizes = [2, 8, 8], strides = [1, 1, 1]} : vector<2x8x32xbf16> to vector<2x8x8xbf16>
    "tpu.trace_start"() <{level = 10 : i32, message = "bqd,bkd->bqk"}> : () -> ()
    %cst_22 = arith.constant dense<0.000000e+00> : vector<2x8x8xf32>
    %46 = tpu.matmul %44, %45, %cst_22 {dimension_numbers = #tpu.dot_dimension_numbers<[2], [2], [1], [1], [0, 0, 0, 1, 1, 1], [0], [0]>} : vector<2x8x8xbf16>, vector<2x8x8xbf16>, vector<2x8x8xf32> -> vector<2x8x8xf32>
    "tpu.trace_stop"() : () -> ()
    %47 = vector.extract_strided_slice %39 {offsets = [0, 0, 8], sizes = [2, 8, 8], strides = [1, 1, 1]} : vector<2x8x32xbf16> to vector<2x8x8xbf16>
    %48 = vector.extract_strided_slice %41 {offsets = [0, 0, 8], sizes = [2, 8, 8], strides = [1, 1, 1]} : vector<2x8x32xbf16> to vector<2x8x8xbf16>
    "tpu.trace_start"() <{level = 10 : i32, message = "bqd,bkd->bqk"}> : () -> ()
    %cst_23 = arith.constant dense<0.000000e+00> : vector<2x8x8xf32>
    %49 = tpu.matmul %47, %48, %cst_23 {dimension_numbers = #tpu.dot_dimension_numbers<[2], [2], [1], [1], [0, 0, 0, 1, 1, 1], [0], [0]>} : vector<2x8x8xbf16>, vector<2x8x8xbf16>, vector<2x8x8xf32> -> vector<2x8x8xf32>
    "tpu.trace_stop"() : () -> ()
    %50 = vector.extract_strided_slice %39 {offsets = [0, 0, 16], sizes = [2, 8, 8], strides = [1, 1, 1]} : vector<2x8x32xbf16> to vector<2x8x8xbf16>
    %51 = vector.extract_strided_slice %41 {offsets = [0, 0, 16], sizes = [2, 8, 8], strides = [1, 1, 1]} : vector<2x8x32xbf16> to vector<2x8x8xbf16>
    "tpu.trace_start"() <{level = 10 : i32, message = "bqd,bkd->bqk"}> : () -> ()
    %cst_24 = arith.constant dense<0.000000e+00> : vector<2x8x8xf32>
    %52 = tpu.matmul %50, %51, %cst_24 {dimension_numbers = #tpu.dot_dimension_numbers<[2], [2], [1], [1], [0, 0, 0, 1, 1, 1], [0], [0]>} : vector<2x8x8xbf16>, vector<2x8x8xbf16>, vector<2x8x8xf32> -> vector<2x8x8xf32>
    "tpu.trace_stop"() : () -> ()
    %53 = vector.extract_strided_slice %39 {offsets = [0, 0, 24], sizes = [2, 8, 8], strides = [1, 1, 1]} : vector<2x8x32xbf16> to vector<2x8x8xbf16>
    %54 = vector.extract_strided_slice %41 {offsets = [0, 0, 24], sizes = [2, 8, 8], strides = [1, 1, 1]} : vector<2x8x32xbf16> to vector<2x8x8xbf16>
    "tpu.trace_start"() <{level = 10 : i32, message = "bqd,bkd->bqk"}> : () -> ()
    %cst_25 = arith.constant dense<0.000000e+00> : vector<2x8x8xf32>
    %55 = tpu.matmul %53, %54, %cst_25 {dimension_numbers = #tpu.dot_dimension_numbers<[2], [2], [1], [1], [0, 0, 0, 1, 1, 1], [0], [0]>} : vector<2x8x8xbf16>, vector<2x8x8xbf16>, vector<2x8x8xf32> -> vector<2x8x8xf32>
    "tpu.trace_stop"() : () -> ()
    %56 = vector.shape_cast %46 : vector<2x8x8xf32> to vector<1x2x8x8xf32>
    %57 = vector.shape_cast %49 : vector<2x8x8xf32> to vector<1x2x8x8xf32>
    %58 = vector.shape_cast %52 : vector<2x8x8xf32> to vector<1x2x8x8xf32>
    %59 = vector.shape_cast %55 : vector<2x8x8xf32> to vector<1x2x8x8xf32>
    %60 = tpu.concatenate %56, %57, %58, %59 in 0 : vector<1x2x8x8xf32>, vector<1x2x8x8xf32>, vector<1x2x8x8xf32>, vector<1x2x8x8xf32> -> vector<4x2x8x8xf32>
    %cst_26 = arith.constant 0.353553385 : f32
    %61 = vector.broadcast %cst_26 : f32 to vector<4x2x8x8xf32>
    %62 = arith.mulf %60, %61 : vector<4x2x8x8xf32>
    %63 = vector.shape_cast %4 : vector<2x1x8xf32> to vector<1x2x1x8xf32>
    %64 = vector.broadcast %63 : vector<1x2x1x8xf32> to vector<4x2x8x8xf32>
    %65 = arith.addf %62, %64 : vector<4x2x8x8xf32>
    %cst_27 = arith.constant dense<0xFF800000> : vector<4x2x8xf32>
    %66 = vector.multi_reduction <maximumf>, %65, %cst_27 [3] : vector<4x2x8x8xf32> to vector<4x2x8xf32>
    %67 = vector.shape_cast %66 : vector<4x2x8xf32> to vector<4x2x8x1xf32>
    %68 = vector.broadcast %67 : vector<4x2x8x1xf32> to vector<4x2x8x8xf32>
    %69 = arith.subf %65, %68 : vector<4x2x8x8xf32>
    %70 = math.exp %69 : vector<4x2x8x8xf32>
    %cst_28 = arith.constant dense<0.000000e+00> : vector<4x2x8xf32>
    %71 = vector.multi_reduction <add>, %70, %cst_28 [3] : vector<4x2x8x8xf32> to vector<4x2x8xf32>
    %72 = vector.shape_cast %71 : vector<4x2x8xf32> to vector<4x2x8x1xf32>
    %73 = tpu.reciprocal %72 {approx = true} : vector<4x2x8x1xf32> -> vector<4x2x8x1xf32>
    %74 = vector.broadcast %73 : vector<4x2x8x1xf32> to vector<4x2x8x8xf32>
    %75 = arith.mulf %70, %74 : vector<4x2x8x8xf32>
    %76 = arith.truncf %75 : vector<4x2x8x8xf32> to vector<4x2x8x8xbf16>
    %c0_29 = arith.constant 0 : index
    %c0_30 = arith.constant 0 : index
    %c0_31 = arith.constant 0 : index
    %77 = vector.load %arg7[%c0_29, %c0_30, %c0_31] : memref<1x32x32xbf16, #tpu.memory_space<vmem>>, vector<1x32x32xbf16>
    %78 = vector.shape_cast %77 : vector<1x32x32xbf16> to vector<32x32xbf16>
    %c0_32 = arith.constant 0 : index
    %c0_33 = arith.constant 0 : index
    %c0_34 = arith.constant 0 : index
    %79 = vector.load %arg8[%c0_32, %c0_33, %c0_34] : memref<1x1x32xf32, #tpu.memory_space<vmem>>, vector<1x1x32xf32>
    %80 = vector.shape_cast %79 : vector<1x1x32xf32> to vector<1x32xf32>
    %81 = vector.extract_strided_slice %76 {offsets = [0, 0, 0, 0], sizes = [1, 2, 8, 8], strides = [1, 1, 1, 1]} : vector<4x2x8x8xbf16> to vector<1x2x8x8xbf16>
    %82 = vector.shape_cast %81 : vector<1x2x8x8xbf16> to vector<2x8x8xbf16>
    %83 = vector.extract_strided_slice %43 {offsets = [0, 0, 0], sizes = [2, 8, 8], strides = [1, 1, 1]} : vector<2x8x32xbf16> to vector<2x8x8xbf16>
    "tpu.trace_start"() <{level = 10 : i32, message = "bqk,bkd->bqd"}> : () -> ()
    %cst_35 = arith.constant dense<0.000000e+00> : vector<2x8x8xf32>
    %84 = tpu.matmul %82, %83, %cst_35 {dimension_numbers = #tpu.dot_dimension_numbers<[2], [1], [1], [2], [0, 0, 0, 1, 1, 2], [0], [0]>} : vector<2x8x8xbf16>, vector<2x8x8xbf16>, vector<2x8x8xf32> -> vector<2x8x8xf32>
    "tpu.trace_stop"() : () -> ()
    %85 = vector.shape_cast %84 : vector<2x8x8xf32> to vector<16x8xf32>
    %86 = arith.truncf %85 : vector<16x8xf32> to vector<16x8xbf16>
    %87 = vector.extract_strided_slice %78 {offsets = [0, 0], sizes = [8, 32], strides = [1, 1]} : vector<32x32xbf16> to vector<8x32xbf16>
    %cst_36 = arith.constant dense<0.000000e+00> : vector<16x32xf32>
    %88 = tpu.matmul %86, %87, %cst_36 {dimension_numbers = #tpu.dot_dimension_numbers<[1], [0], [0], [1], [0, 0, 1, 1], [], []>} : vector<16x8xbf16>, vector<8x32xbf16>, vector<16x32xf32> -> vector<16x32xf32>
    %89 = vector.broadcast %80 : vector<1x32xf32> to vector<16x32xf32>
    %90 = arith.addf %89, %88 : vector<16x32xf32>
    %91 = vector.extract_strided_slice %76 {offsets = [1, 0, 0, 0], sizes = [1, 2, 8, 8], strides = [1, 1, 1, 1]} : vector<4x2x8x8xbf16> to vector<1x2x8x8xbf16>
    %92 = vector.shape_cast %91 : vector<1x2x8x8xbf16> to vector<2x8x8xbf16>
    %93 = vector.extract_strided_slice %43 {offsets = [0, 0, 8], sizes = [2, 8, 8], strides = [1, 1, 1]} : vector<2x8x32xbf16> to vector<2x8x8xbf16>
    "tpu.trace_start"() <{level = 10 : i32, message = "bqk,bkd->bqd"}> : () -> ()
    %cst_37 = arith.constant dense<0.000000e+00> : vector<2x8x8xf32>
    %94 = tpu.matmul %92, %93, %cst_37 {dimension_numbers = #tpu.dot_dimension_numbers<[2], [1], [1], [2], [0, 0, 0, 1, 1, 2], [0], [0]>} : vector<2x8x8xbf16>, vector<2x8x8xbf16>, vector<2x8x8xf32> -> vector<2x8x8xf32>
    "tpu.trace_stop"() : () -> ()
    %95 = vector.shape_cast %94 : vector<2x8x8xf32> to vector<16x8xf32>
    %96 = arith.truncf %95 : vector<16x8xf32> to vector<16x8xbf16>
    %97 = vector.extract_strided_slice %78 {offsets = [8, 0], sizes = [8, 32], strides = [1, 1]} : vector<32x32xbf16> to vector<8x32xbf16>
    %cst_38 = arith.constant dense<0.000000e+00> : vector<16x32xf32>
    %98 = tpu.matmul %96, %97, %cst_38 {dimension_numbers = #tpu.dot_dimension_numbers<[1], [0], [0], [1], [0, 0, 1, 1], [], []>} : vector<16x8xbf16>, vector<8x32xbf16>, vector<16x32xf32> -> vector<16x32xf32>
    %99 = arith.addf %90, %98 : vector<16x32xf32>
    %100 = vector.extract_strided_slice %76 {offsets = [2, 0, 0, 0], sizes = [1, 2, 8, 8], strides = [1, 1, 1, 1]} : vector<4x2x8x8xbf16> to vector<1x2x8x8xbf16>
    %101 = vector.shape_cast %100 : vector<1x2x8x8xbf16> to vector<2x8x8xbf16>
    %102 = vector.extract_strided_slice %43 {offsets = [0, 0, 16], sizes = [2, 8, 8], strides = [1, 1, 1]} : vector<2x8x32xbf16> to vector<2x8x8xbf16>
    "tpu.trace_start"() <{level = 10 : i32, message = "bqk,bkd->bqd"}> : () -> ()
    %cst_39 = arith.constant dense<0.000000e+00> : vector<2x8x8xf32>
    %103 = tpu.matmul %101, %102, %cst_39 {dimension_numbers = #tpu.dot_dimension_numbers<[2], [1], [1], [2], [0, 0, 0, 1, 1, 2], [0], [0]>} : vector<2x8x8xbf16>, vector<2x8x8xbf16>, vector<2x8x8xf32> -> vector<2x8x8xf32>
    "tpu.trace_stop"() : () -> ()
    %104 = vector.shape_cast %103 : vector<2x8x8xf32> to vector<16x8xf32>
    %105 = arith.truncf %104 : vector<16x8xf32> to vector<16x8xbf16>
    %106 = vector.extract_strided_slice %78 {offsets = [16, 0], sizes = [8, 32], strides = [1, 1]} : vector<32x32xbf16> to vector<8x32xbf16>
    %cst_40 = arith.constant dense<0.000000e+00> : vector<16x32xf32>
    %107 = tpu.matmul %105, %106, %cst_40 {dimension_numbers = #tpu.dot_dimension_numbers<[1], [0], [0], [1], [0, 0, 1, 1], [], []>} : vector<16x8xbf16>, vector<8x32xbf16>, vector<16x32xf32> -> vector<16x32xf32>
    %108 = arith.addf %99, %107 : vector<16x32xf32>
    %109 = vector.extract_strided_slice %76 {offsets = [3, 0, 0, 0], sizes = [1, 2, 8, 8], strides = [1, 1, 1, 1]} : vector<4x2x8x8xbf16> to vector<1x2x8x8xbf16>
    %110 = vector.shape_cast %109 : vector<1x2x8x8xbf16> to vector<2x8x8xbf16>
    %111 = vector.extract_strided_slice %43 {offsets = [0, 0, 24], sizes = [2, 8, 8], strides = [1, 1, 1]} : vector<2x8x32xbf16> to vector<2x8x8xbf16>
    "tpu.trace_start"() <{level = 10 : i32, message = "bqk,bkd->bqd"}> : () -> ()
    %cst_41 = arith.constant dense<0.000000e+00> : vector<2x8x8xf32>
    %112 = tpu.matmul %110, %111, %cst_41 {dimension_numbers = #tpu.dot_dimension_numbers<[2], [1], [1], [2], [0, 0, 0, 1, 1, 2], [0], [0]>} : vector<2x8x8xbf16>, vector<2x8x8xbf16>, vector<2x8x8xf32> -> vector<2x8x8xf32>
    "tpu.trace_stop"() : () -> ()
    %113 = vector.shape_cast %112 : vector<2x8x8xf32> to vector<16x8xf32>
    %114 = arith.truncf %113 : vector<16x8xf32> to vector<16x8xbf16>
    %115 = vector.extract_strided_slice %78 {offsets = [24, 0], sizes = [8, 32], strides = [1, 1]} : vector<32x32xbf16> to vector<8x32xbf16>
    %cst_42 = arith.constant dense<0.000000e+00> : vector<16x32xf32>
    %116 = tpu.matmul %114, %115, %cst_42 {dimension_numbers = #tpu.dot_dimension_numbers<[1], [0], [0], [1], [0, 0, 1, 1], [], []>} : vector<16x8xbf16>, vector<8x32xbf16>, vector<16x32xf32> -> vector<16x32xf32>
    %117 = arith.addf %108, %116 : vector<16x32xf32>
    %118 = arith.addf %3, %117 : vector<16x32xf32>
    %c0_43 = arith.constant 0 : index
    %c0_44 = arith.constant 0 : index
    %c0_45 = arith.constant 0 : index
    %119 = vector.load %arg9[%c0_43, %c0_44, %c0_45] : memref<1x1x32xf32, #tpu.memory_space<vmem>>, vector<1x1x32xf32>
    %120 = vector.shape_cast %119 : vector<1x1x32xf32> to vector<1x32xf32>
    %c0_46 = arith.constant 0 : index
    %c0_47 = arith.constant 0 : index
    %c0_48 = arith.constant 0 : index
    %121 = vector.load %arg10[%c0_46, %c0_47, %c0_48] : memref<1x1x32xf32, #tpu.memory_space<vmem>>, vector<1x1x32xf32>
    %122 = vector.shape_cast %121 : vector<1x1x32xf32> to vector<1x32xf32>
    %cst_49 = arith.constant dense<0.000000e+00> : vector<16xf32>
    %123 = vector.multi_reduction <add>, %118, %cst_49 [1] : vector<16x32xf32> to vector<16xf32>
    %124 = vector.shape_cast %123 : vector<16xf32> to vector<16x1xf32>
    %cst_50 = arith.constant 3.200000e+01 : f32
    %125 = vector.broadcast %cst_50 : f32 to vector<16x1xf32>
    %126 = arith.divf %124, %125 : vector<16x1xf32>
    %127 = vector.broadcast %126 : vector<16x1xf32> to vector<16x32xf32>
    %128 = arith.subf %118, %127 : vector<16x32xf32>
    %129 = arith.mulf %128, %128 : vector<16x32xf32>
    %cst_51 = arith.constant dense<0.000000e+00> : vector<16xf32>
    %130 = vector.multi_reduction <add>, %129, %cst_51 [1] : vector<16x32xf32> to vector<16xf32>
    %131 = vector.shape_cast %130 : vector<16xf32> to vector<16x1xf32>
    %cst_52 = arith.constant 0.0322580636 : f32
    %132 = vector.broadcast %cst_52 : f32 to vector<16x1xf32>
    %133 = arith.mulf %131, %132 : vector<16x1xf32>
    %134 = vector.broadcast %120 : vector<1x32xf32> to vector<16x32xf32>
    %135 = arith.mulf %134, %128 : vector<16x32xf32>
    %136 = math.sqrt %133 : vector<16x1xf32>
    %cst_53 = arith.constant 9.99999997E-7 : f32
    %137 = vector.broadcast %cst_53 : f32 to vector<16x1xf32>
    %138 = arith.addf %136, %137 : vector<16x1xf32>
    %139 = vector.broadcast %138 : vector<16x1xf32> to vector<16x32xf32>
    %140 = arith.divf %135, %139 : vector<16x32xf32>
    %141 = vector.broadcast %122 : vector<1x32xf32> to vector<16x32xf32>
    %142 = arith.addf %140, %141 : vector<16x32xf32>
    %143 = arith.truncf %142 : vector<16x32xf32> to vector<16x32xbf16>
    %c0_54 = arith.constant 0 : index
    %c0_55 = arith.constant 0 : index
    %c0_56 = arith.constant 0 : index
    %144 = vector.load %arg11[%c0_54, %c0_55, %c0_56] : memref<1x32x64xbf16, #tpu.memory_space<vmem>>, vector<1x32x64xbf16>
    %145 = vector.shape_cast %144 : vector<1x32x64xbf16> to vector<32x64xbf16>
    %cst_57 = arith.constant dense<0.000000e+00> : vector<16x64xf32>
    %146 = tpu.matmul %143, %145, %cst_57 {dimension_numbers = #tpu.dot_dimension_numbers<[1], [0], [0], [1], [0, 0, 1, 1], [], []>} : vector<16x32xbf16>, vector<32x64xbf16>, vector<16x64xf32> -> vector<16x64xf32>
    %c0_58 = arith.constant 0 : index
    %c0_59 = arith.constant 0 : index
    %c0_60 = arith.constant 0 : index
    %147 = vector.load %arg12[%c0_58, %c0_59, %c0_60] : memref<1x1x64xf32, #tpu.memory_space<vmem>>, vector<1x1x64xf32>
    %148 = vector.shape_cast %147 : vector<1x1x64xf32> to vector<1x64xf32>
    %149 = vector.broadcast %148 : vector<1x64xf32> to vector<16x64xf32>
    %150 = arith.addf %146, %149 : vector<16x64xf32>
    %cst_61 = arith.constant 0.000000e+00 : f32
    %151 = vector.broadcast %cst_61 : f32 to vector<16x64xf32>
    %152 = arith.maximumf %150, %151 : vector<16x64xf32>
    %153 = arith.truncf %152 : vector<16x64xf32> to vector<16x64xbf16>
    %c0_62 = arith.constant 0 : index
    %c0_63 = arith.constant 0 : index
    %c0_64 = arith.constant 0 : index
    %154 = vector.load %arg13[%c0_62, %c0_63, %c0_64] : memref<1x64x32xbf16, #tpu.memory_space<vmem>>, vector<1x64x32xbf16>
    %155 = vector.shape_cast %154 : vector<1x64x32xbf16> to vector<64x32xbf16>
    %cst_65 = arith.constant dense<0.000000e+00> : vector<16x32xf32>
    %156 = tpu.matmul %153, %155, %cst_65 {dimension_numbers = #tpu.dot_dimension_numbers<[1], [0], [0], [1], [0, 0, 1, 1], [], []>} : vector<16x64xbf16>, vector<64x32xbf16>, vector<16x32xf32> -> vector<16x32xf32>
    %c0_66 = arith.constant 0 : index
    %c0_67 = arith.constant 0 : index
    %c0_68 = arith.constant 0 : index
    %157 = vector.load %arg14[%c0_66, %c0_67, %c0_68] : memref<1x1x32xf32, #tpu.memory_space<vmem>>, vector<1x1x32xf32>
    %158 = vector.shape_cast %157 : vector<1x1x32xf32> to vector<1x32xf32>
    %159 = vector.broadcast %158 : vector<1x32xf32> to vector<16x32xf32>
    %160 = arith.addf %156, %159 : vector<16x32xf32>
    %161 = arith.addf %118, %160 : vector<16x32xf32>
    %c0_69 = arith.constant 0 : index
    %c0_70 = arith.constant 0 : index
    %162 = vector.load %arg18[%c0_69, %c0_70] : memref<16x32xf32, #tpu.memory_space<vmem>>, vector<16x32xf32>
    tpu.vector_store %arg18[%c0_69, %c0_70], %161 {strides = array<i32>} : memref<16x32xf32, #tpu.memory_space<vmem>>, vector<16x32xf32>,
    %c1_i32 = arith.constant 1 : i32
    %163 = arith.cmpi eq, %arg0, %c1_i32 : i32
    %164 = arith.extui %163 : i1 to i32
    %c0_i32_71 = arith.constant 0 : i32
    %165 = arith.cmpi ne, %164, %c0_i32_71 : i32
    scf.if %165 {
      %c0_72 = arith.constant 0 : index
      %c0_73 = arith.constant 0 : index
      %166 = vector.load %arg15[%c0_72, %c0_73] : memref<1x32xf32, #tpu.memory_space<vmem>>, vector<1x32xf32>
      %c0_74 = arith.constant 0 : index
      %c0_75 = arith.constant 0 : index
      %167 = vector.load %arg16[%c0_74, %c0_75] : memref<1x32xf32, #tpu.memory_space<vmem>>, vector<1x32xf32>
      %cst_76 = arith.constant dense<0.000000e+00> : vector<16xf32>
      %168 = vector.multi_reduction <add>, %161, %cst_76 [1] : vector<16x32xf32> to vector<16xf32>
      %169 = vector.shape_cast %168 : vector<16xf32> to vector<16x1xf32>
      %cst_77 = arith.constant 3.200000e+01 : f32
      %170 = vector.broadcast %cst_77 : f32 to vector<16x1xf32>
      %171 = arith.divf %169, %170 : vector<16x1xf32>
      %172 = vector.broadcast %171 : vector<16x1xf32> to vector<16x32xf32>
      %173 = arith.subf %161, %172 : vector<16x32xf32>
      %174 = arith.mulf %173, %173 : vector<16x32xf32>
      %cst_78 = arith.constant dense<0.000000e+00> : vector<16xf32>
      %175 = vector.multi_reduction <add>, %174, %cst_78 [1] : vector<16x32xf32> to vector<16xf32>
      %176 = vector.shape_cast %175 : vector<16xf32> to vector<16x1xf32>
      %cst_79 = arith.constant 0.0322580636 : f32
      %177 = vector.broadcast %cst_79 : f32 to vector<16x1xf32>
      %178 = arith.mulf %176, %177 : vector<16x1xf32>
      %179 = vector.broadcast %166 : vector<1x32xf32> to vector<16x32xf32>
      %180 = arith.mulf %179, %173 : vector<16x32xf32>
      %181 = math.sqrt %178 : vector<16x1xf32>
      %cst_80 = arith.constant 9.99999997E-7 : f32
      %182 = vector.broadcast %cst_80 : f32 to vector<16x1xf32>
      %183 = arith.addf %181, %182 : vector<16x1xf32>
      %184 = vector.broadcast %183 : vector<16x1xf32> to vector<16x32xf32>
      %185 = arith.divf %180, %184 : vector<16x32xf32>
      %186 = vector.broadcast %167 : vector<1x32xf32> to vector<16x32xf32>
      %187 = arith.addf %185, %186 : vector<16x32xf32>
      %c0_81 = arith.constant 0 : index
      %c0_82 = arith.constant 0 : index
      %188 = vector.load %arg17[%c0_81, %c0_82] : memref<16x32xf32, #tpu.memory_space<vmem>>, vector<16x32xf32>
      tpu.vector_store %arg17[%c0_81, %c0_82], %187 {strides = array<i32>} : memref<16x32xf32, #tpu.memory_space<vmem>>, vector<16x32xf32>,
    } else {
    }
    return
  }
  func.func @transform_0(%arg0: i32) -> (i32, i32) {
    %c0_i32 = arith.constant 0 : i32
    %c0_i32_0 = arith.constant 0 : i32
    %c0_i32_1 = arith.constant 0 : i32
    return %c0_i32, %c0_i32_0 : i32, i32
  }
  func.func @transform_1(%arg0: i32) -> (i32, i32, i32) {
    %c0_i32 = arith.constant 0 : i32
    %c0_i32_0 = arith.constant 0 : i32
    %c0_i32_1 = arith.constant 0 : i32
    %c0_i32_2 = arith.constant 0 : i32
    return %c0_i32, %c0_i32_0, %c0_i32_1 : i32, i32, i32
  }
  func.func @transform_2(%arg0: i32) -> (i32, i32, i32) {
    %c0_i32 = arith.constant 0 : i32
    %c0_i32_0 = arith.constant 0 : i32
    %c0_i32_1 = arith.constant 0 : i32
    return %arg0, %c0_i32, %c0_i32_0 : i32, i32, i32
  }
  func.func @transform_3(%arg0: i32) -> (i32, i32, i32) {
    %c0_i32 = arith.constant 0 : i32
    %c0_i32_0 = arith.constant 0 : i32
    %c0_i32_1 = arith.constant 0 : i32
    return %arg0, %c0_i32, %c0_i32_0 : i32, i32, i32
  }
  func.func @transform_4(%arg0: i32) -> (i32, i32, i32) {
    %c0_i32 = arith.constant 0 : i32
    %c0_i32_0 = arith.constant 0 : i32
    %c0_i32_1 = arith.constant 0 : i32
    return %arg0, %c0_i32, %c0_i32_0 : i32, i32, i32
  }
  func.func @transform_5(%arg0: i32) -> (i32, i32, i32) {
    %c0_i32 = arith.constant 0 : i32
    %c0_i32_0 = arith.constant 0 : i32
    %c0_i32_1 = arith.constant 0 : i32
    return %arg0, %c0_i32, %c0_i32_0 : i32, i32, i32
  }
  func.func @transform_6(%arg0: i32) -> (i32, i32, i32) {
    %c0_i32 = arith.constant 0 : i32
    %c0_i32_0 = arith.constant 0 : i32
    %c0_i32_1 = arith.constant 0 : i32
    return %arg0, %c0_i32, %c0_i32_0 : i32, i32, i32
  }
  func.func @transform_7(%arg0: i32) -> (i32, i32, i32) {
    %c0_i32 = arith.constant 0 : i32
    %c0_i32_0 = arith.constant 0 : i32
    %c0_i32_1 = arith.constant 0 : i32
    return %arg0, %c0_i32, %c0_i32_0 : i32, i32, i32
  }
  func.func @transform_8(%arg0: i32) -> (i32, i32, i32) {
    %c0_i32 = arith.constant 0 : i32
    %c0_i32_0 = arith.constant 0 : i32
    %c0_i32_1 = arith.constant 0 : i32
    return %arg0, %c0_i32, %c0_i32_0 : i32, i32, i32
  }
  func.func @transform_9(%arg0: i32) -> (i32, i32, i32) {
    %c0_i32 = arith.constant 0 : i32
    %c0_i32_0 = arith.constant 0 : i32
    %c0_i32_1 = arith.constant 0 : i32
    return %arg0, %c0_i32, %c0_i32_0 : i32, i32, i32
  }
  func.func @transform_10(%arg0: i32) -> (i32, i32, i32) {
    %c0_i32 = arith.constant 0 : i32
    %c0_i32_0 = arith.constant 0 : i32
    %c0_i32_1 = arith.constant 0 : i32
    return %arg0, %c0_i32, %c0_i32_0 : i32, i32, i32
  }
  func.func @transform_11(%arg0: i32) -> (i32, i32, i32) {
    %c0_i32 = arith.constant 0 : i32
    %c0_i32_0 = arith.constant 0 : i32
    %c0_i32_1 = arith.constant 0 : i32
    return %arg0, %c0_i32, %c0_i32_0 : i32, i32, i32
  }
  func.func @transform_12(%arg0: i32) -> (i32, i32, i32) {
    %c0_i32 = arith.constant 0 : i32
    %c0_i32_0 = arith.constant 0 : i32
    %c0_i32_1 = arith.constant 0 : i32
    return %arg0, %c0_i32, %c0_i32_0 : i32, i32, i32
  }
  func.func @transform_13(%arg0: i32) -> (i32, i32, i32) {
    %c0_i32 = arith.constant 0 : i32
    %c0_i32_0 = arith.constant 0 : i32
    %c0_i32_1 = arith.constant 0 : i32
    return %arg0, %c0_i32, %c0_i32_0 : i32, i32, i32
  }
  func.func @transform_14(%arg0: i32) -> (i32, i32) {
    %c0_i32 = arith.constant 0 : i32
    %c0_i32_0 = arith.constant 0 : i32
    %c0_i32_1 = arith.constant 0 : i32
    return %c0_i32, %c0_i32_0 : i32, i32
  }
  func.func @transform_15(%arg0: i32) -> (i32, i32) {
    %c0_i32 = arith.constant 0 : i32
    %c0_i32_0 = arith.constant 0 : i32
    %c0_i32_1 = arith.constant 0 : i32
    return %c0_i32, %c0_i32_0 : i32, i32
  }
  func.func @transform_16(%arg0: i32) -> (i32, i32) {
    %c0_i32 = arith.constant 0 : i32
    %c0_i32_0 = arith.constant 0 : i32
    %c0_i32_1 = arith.constant 0 : i32
    return %c0_i32, %c0_i32_0 : i32, i32
  }
}

</mosaic_0001>

<llo_original>
// kernel: tpu_custom_call.1
$region0: #{tpu_custom_call.1}
  #allocation0 [shape = 'u32[]', space=smem, size = 0x4, offset = 0x4, fixed_abs, tag = 'smem constant byte address 0x4 - core index']
  #allocation1 [shape = 'u32[144,128]{1,0:T(1,128)}', space=vmem, size = 0x12000, scoped, tag = 'internal scratch']
  #allocation2 [shape = 'f32[16,32]{1,0:T(8,128)}', space=vmem, size = 0x2000, scoped, tag = 'scratch operand']
  %s0 = inlined_call_operand.hbm [shape: f32[16,32], index: 0, kind: input, shape index: {}]
  %s1 = inlined_call_operand.vmem [shape: f32[2,1,8], index: 1, kind: input, shape index: {}]
  %s2 = inlined_call_operand.vmem [shape: f32[2,1,32], index: 2, kind: input, shape index: {}]
  %s3 = inlined_call_operand.vmem [shape: f32[2,1,32], index: 3, kind: input, shape index: {}]
  %s4 = inlined_call_operand.vmem [shape: bf16[2,32,96], index: 4, kind: input, shape index: {}]
  %s5 = inlined_call_operand.vmem [shape: f32[2,1,96], index: 5, kind: input, shape index: {}]
  %s6 = inlined_call_operand.vmem [shape: bf16[2,32,32], index: 6, kind: input, shape index: {}]
  %s7 = inlined_call_operand.vmem [shape: f32[2,1,32], index: 7, kind: input, shape index: {}]
  %s8 = inlined_call_operand.vmem [shape: f32[2,1,32], index: 8, kind: input, shape index: {}]
  %s9 = inlined_call_operand.hbm [shape: f32[2,1,32], index: 9, kind: input, shape index: {}]
  %s10 = inlined_call_operand.vmem [shape: bf16[2,32,64], index: 10, kind: input, shape index: {}]
  %s11 = inlined_call_operand.hbm [shape: f32[2,1,64], index: 11, kind: input, shape index: {}]
  %s12 = inlined_call_operand.vmem [shape: bf16[2,64,32], index: 12, kind: input, shape index: {}]
  %s13 = inlined_call_operand.vmem [shape: f32[2,1,32], index: 13, kind: input, shape index: {}]
  %s14 = inlined_call_operand.vmem [shape: f32[1,32], index: 14, kind: input, shape index: {}]
  %s15 = inlined_call_operand.vmem [shape: f32[1,32], index: 15, kind: input, shape index: {}]
  %s16 = inlined_call_operand.hbm [shape: f32[16,32], index: 16, kind: output, shape index: {}]
  %s17 = sld [smem:[#allocation0]]
  $region117: #{tpu_custom_call.1} parent=0
    _
  %s19 = ssub.s32 1, %s17
  %s20 = scalar_select 0, %s19, %s17
  $region1: #{tpu_custom_call.1} parent=0
    #allocation3 [shape = 'u8[8192]{0}', space=vmem, size = 0x2000, scoped, tag = 'input window, operand 0, single buffered']
    #allocation4 [shape = 's32[2]{0}', space=sflag, size = 0x8, scoped, tag = 'scoped memory for tpu_custom_call.1']
    #allocation5 [shape = 's32[2]{0}', space=sflag, size = 0x8, scoped, tag = 'scoped memory for tpu_custom_call.1']
    #allocation6 [shape = 'u8[1024]{0}', space=vmem, size = 0x400, scoped, tag = 'input window, operand 9']
    #allocation7 [shape = 's32[2]{0}', space=sflag, size = 0x8, scoped, tag = 'scoped memory for tpu_custom_call.1']
    #allocation8 [shape = 'u8[1024]{0}', space=vmem, size = 0x400, scoped, tag = 'input window, operand 11']
    #allocation9 [shape = 'u8[8192]{0}', space=vmem, size = 0x2000, scoped, tag = 'output window, operand 0, single buffered']
    %21 = vsyncpa [#allocation4], 0
    %22 = vsyncpa [#allocation7], 0
    %s23 = scalar_lea.sflag [#allocation7], 1
    %24 = vsyncpa %s23, 0
    %25 = vsyncpa [#allocation5], 0
    loop: start=0, step=1, limit=4
    $region2: #{tpu_custom_call.1} parent=1 // loop_pre_header
      _
    $region3: #{tpu_custom_call.1} parent=1 // loop_header
      %s27 = sphi 0, %s31
      %p28 = scmp.ge.s32.totalorder %s27, 4
      %s35 = sphi 0, %s35
      %s37 = sphi 0, %s35
      %s38 = sphi 0, %s37
      %s52 = sphi 0, %s38
      %s56 = sphi 0, %s56
      %s58 = sphi 0, %s56
      %s59 = sphi 0, %s58
      %s73 = sphi 0, %s59
      %s79 = sphi 0, %s81
      %s82 = sphi 0, %s79
      %s83 = sphi 0, %s82
      %s99 = sphi 0, %s83
      %s105 = sphi 0, %s107
      %s108 = sphi 0, %s105
      %s109 = sphi 0, %s108
      %s125 = sphi 0, %s109
      %s131 = sphi 0, %s133
      %s134 = sphi 0, %s131
      %s135 = sphi 0, %s134
      %s151 = sphi 0, %s135
      %s157 = sphi 0, %s159
      %s160 = sphi 0, %s157
      %s161 = sphi 0, %s160
      %s177 = sphi 0, %s161
      %s183 = sphi 0, %s185
      %s186 = sphi 0, %s183
      %s187 = sphi 0, %s186
      %s203 = sphi 0, %s187
      %s209 = sphi 0, %s211
      %s212 = sphi 0, %s209
      %s213 = sphi 0, %s212
      %s229 = sphi 0, %s213
      %s235 = sphi 0, %s237
      %s238 = sphi 0, %s235
      %s239 = sphi 0, %s238
      %s255 = sphi 0, %s239
      %s261 = sphi 0, %s263
      %s264 = sphi 0, %s261
      %s265 = sphi 0, %s264
      %s281 = sphi 0, %s265
      %s287 = sphi 0, %s289
      %s290 = sphi 0, %s287
      %s291 = sphi 0, %s290
      %s307 = sphi 0, %s291
      %s313 = sphi 0, %s315
      %s316 = sphi 0, %s313
      %s317 = sphi 0, %s316
      %s333 = sphi 0, %s317
      %s339 = sphi 0, %s341
      %s342 = sphi 0, %s339
      %s343 = sphi 0, %s342
      %s359 = sphi 0, %s343
      %s365 = sphi 0, %s367
      %s368 = sphi 0, %s365
      %s369 = sphi 0, %s368
      %s385 = sphi 0, %s369
      %s389 = sphi 0, %s389
      %s391 = sphi 0, %s389
      %s392 = sphi 0, %s391
      %s406 = sphi 0, %s392
      %s410 = sphi 0, %s410
      %s412 = sphi 0, %s410
      %s413 = sphi 0, %s412
      %s427 = sphi 0, %s413
      %s431 = sphi 0, %s431
      %s433 = sphi 0, %s431
      %s434 = sphi 0, %s433
      %s448 = sphi 0, %s434
    $region4: #{tpu_custom_call.1} parent=1 // loop_header_branch
      %30 = sbr.rel (%p28) target = $region8
    $region5: #{tpu_custom_call.1} parent=1 // loop_body
      %s32 = ssub.s32 %s27, 1
      %s33 = ssub.s32 %s27, 2
      %s34 = sadd.s32 %s27, 1
      %s36 = sadd.s32 %s35, 1
      %p39 = scmp.eq.s32.totalorder %s27, 1
      %p40 = scmp.ne.s32.totalorder %s35, %s37
      %p41 = scmp.eq.s32.totalorder %s27, 0
      %p42 = por %p40, %p41
      %p43 = scmp.ne.s32.totalorder %s35, %s37
      %p44 = scmp.eq.s32.totalorder %s32, 1
      %p45 = por %p43, %p44
      %p46 = scmp.ne.s32.totalorder %s37, %s38
      %p47 = scmp.eq.s32.totalorder %s32, 0
      %p48 = por %p46, %p47
      %p49 = scmp.ne.s32.totalorder %s37, %s38
      %p50 = scmp.eq.s32.totalorder %s33, 1
      %p51 = por %p49, %p50
      %p53 = scmp.ne.s32.totalorder %s38, %s52
      %p54 = scmp.eq.s32.totalorder %s33, 0
      %p55 = por %p53, %p54
      %s57 = sadd.s32 %s56, 1
      %p60 = scmp.eq.s32.totalorder %s27, 1
      %p61 = scmp.ne.s32.totalorder %s56, %s58
      %p62 = scmp.eq.s32.totalorder %s27, 0
      %p63 = por %p61, %p62
      %p64 = scmp.ne.s32.totalorder %s56, %s58
      %p65 = scmp.eq.s32.totalorder %s32, 1
      %p66 = por %p64, %p65
      %p67 = scmp.ne.s32.totalorder %s58, %s59
      %p68 = scmp.eq.s32.totalorder %s32, 0
      %p69 = por %p67, %p68
      %p70 = scmp.ne.s32.totalorder %s58, %s59
      %p71 = scmp.eq.s32.totalorder %s33, 1
      %p72 = por %p70, %p71
      %p74 = scmp.ne.s32.totalorder %s59, %s73
      %p75 = scmp.eq.s32.totalorder %s33, 0
      %p76 = por %p74, %p75
      %s77 = ssub.s32 %s27, %s34
      %p78 = scmp.eq.s32.totalorder %s77, 0
      %s80 = sadd.s32 %s79, 1
      %s81 = scalar_select %p78, %s79, %s80
      %p84 = pneg %p78
      %p85 = scmp.eq.s32.totalorder %s27, 1
      %p86 = por %p84, %p85
      %p87 = scmp.ne.s32.totalorder %s79, %s82
      %p88 = scmp.eq.s32.totalorder %s27, 0
      %p89 = por %p87, %p88
      %p90 = scmp.ne.s32.totalorder %s79, %s82
      %p91 = scmp.eq.s32.totalorder %s32, 1
      %p92 = por %p90, %p91
      %p93 = scmp.ne.s32.totalorder %s82, %s83
      %p94 = scmp.eq.s32.totalorder %s32, 0
      %p95 = por %p93, %p94
      %p96 = scmp.ne.s32.totalorder %s82, %s83
      %p97 = scmp.eq.s32.totalorder %s33, 1
      %p98 = por %p96, %p97
      %p100 = scmp.ne.s32.totalorder %s83, %s99
      %p101 = scmp.eq.s32.totalorder %s33, 0
      %p102 = por %p100, %p101
      %s103 = ssub.s32 %s27, %s34
      %p104 = scmp.eq.s32.totalorder %s103, 0
      %s106 = sadd.s32 %s105, 1
      %s107 = scalar_select %p104, %s105, %s106
      %p110 = pneg %p104
      %p111 = scmp.eq.s32.totalorder %s27, 1
      %p112 = por %p110, %p111
      %p113 = scmp.ne.s32.totalorder %s105, %s108
      %p114 = scmp.eq.s32.totalorder %s27, 0
      %p115 = por %p113, %p114
      %p116 = scmp.ne.s32.totalorder %s105, %s108
      %p117 = scmp.eq.s32.totalorder %s32, 1
      %p118 = por %p116, %p117
      %p119 = scmp.ne.s32.totalorder %s108, %s109
      %p120 = scmp.eq.s32.totalorder %s32, 0
      %p121 = por %p119, %p120
      %p122 = scmp.ne.s32.totalorder %s108, %s109
      %p123 = scmp.eq.s32.totalorder %s33, 1
      %p124 = por %p122, %p123
      %p126 = scmp.ne.s32.totalorder %s109, %s125
      %p127 = scmp.eq.s32.totalorder %s33, 0
      %p128 = por %p126, %p127
      %s129 = ssub.s32 %s27, %s34
      %p130 = scmp.eq.s32.totalorder %s129, 0
      %s132 = sadd.s32 %s131, 1
      %s133 = scalar_select %p130, %s131, %s132
      %p136 = pneg %p130
      %p137 = scmp.eq.s32.totalorder %s27, 1
      %p138 = por %p136, %p137
      %p139 = scmp.ne.s32.totalorder %s131, %s134
      %p140 = scmp.eq.s32.totalorder %s27, 0
      %p141 = por %p139, %p140
      %p142 = scmp.ne.s32.totalorder %s131, %s134
      %p143 = scmp.eq.s32.totalorder %s32, 1
      %p144 = por %p142, %p143
      %p145 = scmp.ne.s32.totalorder %s134, %s135
      %p146 = scmp.eq.s32.totalorder %s32, 0
      %p147 = por %p145, %p146
      %p148 = scmp.ne.s32.totalorder %s134, %s135
      %p149 = scmp.eq.s32.totalorder %s33, 1
      %p150 = por %p148, %p149
      %p152 = scmp.ne.s32.totalorder %s135, %s151
      %p153 = scmp.eq.s32.totalorder %s33, 0
      %p154 = por %p152, %p153
      %s155 = ssub.s32 %s27, %s34
      %p156 = scmp.eq.s32.totalorder %s155, 0
      %s158 = sadd.s32 %s157, 1
      %s159 = scalar_select %p156, %s157, %s158
      %p162 = pneg %p156
      %p163 = scmp.eq.s32.totalorder %s27, 1
      %p164 = por %p162, %p163
      %p165 = scmp.ne.s32.totalorder %s157, %s160
      %p166 = scmp.eq.s32.totalorder %s27, 0
      %p167 = por %p165, %p166
      %p168 = scmp.ne.s32.totalorder %s157, %s160
      %p169 = scmp.eq.s32.totalorder %s32, 1
      %p170 = por %p168, %p169
      %p171 = scmp.ne.s32.totalorder %s160, %s161
      %p172 = scmp.eq.s32.totalorder %s32, 0
      %p173 = por %p171, %p172
      %p174 = scmp.ne.s32.totalorder %s160, %s161
      %p175 = scmp.eq.s32.totalorder %s33, 1
      %p176 = por %p174, %p175
      %p178 = scmp.ne.s32.totalorder %s161, %s177
      %p179 = scmp.eq.s32.totalorder %s33, 0
      %p180 = por %p178, %p179
      %s181 = ssub.s32 %s27, %s34
      %p182 = scmp.eq.s32.totalorder %s181, 0
      %s184 = sadd.s32 %s183, 1
      %s185 = scalar_select %p182, %s183, %s184
      %p188 = pneg %p182
      %p189 = scmp.eq.s32.totalorder %s27, 1
      %p190 = por %p188, %p189
      %p191 = scmp.ne.s32.totalorder %s183, %s186
      %p192 = scmp.eq.s32.totalorder %s27, 0
      %p193 = por %p191, %p192
      %p194 = scmp.ne.s32.totalorder %s183, %s186
      %p195 = scmp.eq.s32.totalorder %s32, 1
      %p196 = por %p194, %p195
      %p197 = scmp.ne.s32.totalorder %s186, %s187
      %p198 = scmp.eq.s32.totalorder %s32, 0
      %p199 = por %p197, %p198
      %p200 = scmp.ne.s32.totalorder %s186, %s187
      %p201 = scmp.eq.s32.totalorder %s33, 1
      %p202 = por %p200, %p201
      %p204 = scmp.ne.s32.totalorder %s187, %s203
      %p205 = scmp.eq.s32.totalorder %s33, 0
      %p206 = por %p204, %p205
      %s207 = ssub.s32 %s27, %s34
      %p208 = scmp.eq.s32.totalorder %s207, 0
      %s210 = sadd.s32 %s209, 1
      %s211 = scalar_select %p208, %s209, %s210
      %p214 = pneg %p208
      %p215 = scmp.eq.s32.totalorder %s27, 1
      %p216 = por %p214, %p215
      %p217 = scmp.ne.s32.totalorder %s209, %s212
      %p218 = scmp.eq.s32.totalorder %s27, 0
      %p219 = por %p217, %p218
      %p220 = scmp.ne.s32.totalorder %s209, %s212
      %p221 = scmp.eq.s32.totalorder %s32, 1
      %p222 = por %p220, %p221
      %p223 = scmp.ne.s32.totalorder %s212, %s213
      %p224 = scmp.eq.s32.totalorder %s32, 0
      %p225 = por %p223, %p224
      %p226 = scmp.ne.s32.totalorder %s212, %s213
      %p227 = scmp.eq.s32.totalorder %s33, 1
      %p228 = por %p226, %p227
      %p230 = scmp.ne.s32.totalorder %s213, %s229
      %p231 = scmp.eq.s32.totalorder %s33, 0
      %p232 = por %p230, %p231
      %s233 = ssub.s32 %s27, %s34
      %p234 = scmp.eq.s32.totalorder %s233, 0
      %s236 = sadd.s32 %s235, 1
      %s237 = scalar_select %p234, %s235, %s236
      %p240 = pneg %p234
      %p241 = scmp.eq.s32.totalorder %s27, 1
      %p242 = por %p240, %p241
      %p243 = scmp.ne.s32.totalorder %s235, %s238
      %p244 = scmp.eq.s32.totalorder %s27, 0
      %p245 = por %p243, %p244
      %p246 = scmp.ne.s32.totalorder %s235, %s238
      %p247 = scmp.eq.s32.totalorder %s32, 1
      %p248 = por %p246, %p247
      %p249 = scmp.ne.s32.totalorder %s238, %s239
      %p250 = scmp.eq.s32.totalorder %s32, 0
      %p251 = por %p249, %p250
      %p252 = scmp.ne.s32.totalorder %s238, %s239
      %p253 = scmp.eq.s32.totalorder %s33, 1
      %p254 = por %p252, %p253
      %p256 = scmp.ne.s32.totalorder %s239, %s255
      %p257 = scmp.eq.s32.totalorder %s33, 0
      %p258 = por %p256, %p257
      %s259 = ssub.s32 %s27, %s34
      %p260 = scmp.eq.s32.totalorder %s259, 0
      %s262 = sadd.s32 %s261, 1
      %s263 = scalar_select %p260, %s261, %s262
      %p266 = pneg %p260
      %p267 = scmp.eq.s32.totalorder %s27, 1
      %p268 = por %p266, %p267
      %p269 = scmp.ne.s32.totalorder %s261, %s264
      %p270 = scmp.eq.s32.totalorder %s27, 0
      %p271 = por %p269, %p270
      %p272 = scmp.ne.s32.totalorder %s261, %s264
      %p273 = scmp.eq.s32.totalorder %s32, 1
      %p274 = por %p272, %p273
      %p275 = scmp.ne.s32.totalorder %s264, %s265
      %p276 = scmp.eq.s32.totalorder %s32, 0
      %p277 = por %p275, %p276
      %p278 = scmp.ne.s32.totalorder %s264, %s265
      %p279 = scmp.eq.s32.totalorder %s33, 1
      %p280 = por %p278, %p279
      %p282 = scmp.ne.s32.totalorder %s265, %s281
      %p283 = scmp.eq.s32.totalorder %s33, 0
      %p284 = por %p282, %p283
      %s285 = ssub.s32 %s27, %s34
      %p286 = scmp.eq.s32.totalorder %s285, 0
      %s288 = sadd.s32 %s287, 1
      %s289 = scalar_select %p286, %s287, %s288
      %p292 = pneg %p286
      %p293 = scmp.eq.s32.totalorder %s27, 1
      %p294 = por %p292, %p293
      %p295 = scmp.ne.s32.totalorder %s287, %s290
      %p296 = scmp.eq.s32.totalorder %s27, 0
      %p297 = por %p295, %p296
      %p298 = scmp.ne.s32.totalorder %s287, %s290
      %p299 = scmp.eq.s32.totalorder %s32, 1
      %p300 = por %p298, %p299
      %p301 = scmp.ne.s32.totalorder %s290, %s291
      %p302 = scmp.eq.s32.totalorder %s32, 0
      %p303 = por %p301, %p302
      %p304 = scmp.ne.s32.totalorder %s290, %s291
      %p305 = scmp.eq.s32.totalorder %s33, 1
      %p306 = por %p304, %p305
      %p308 = scmp.ne.s32.totalorder %s291, %s307
      %p309 = scmp.eq.s32.totalorder %s33, 0
      %p310 = por %p308, %p309
      %s311 = ssub.s32 %s27, %s34
      %p312 = scmp.eq.s32.totalorder %s311, 0
      %s314 = sadd.s32 %s313, 1
      %s315 = scalar_select %p312, %s313, %s314
      %p318 = pneg %p312
      %p319 = scmp.eq.s32.totalorder %s27, 1
      %p320 = por %p318, %p319
      %p321 = scmp.ne.s32.totalorder %s313, %s316
      %p322 = scmp.eq.s32.totalorder %s27, 0
      %p323 = por %p321, %p322
      %p324 = scmp.ne.s32.totalorder %s313, %s316
      %p325 = scmp.eq.s32.totalorder %s32, 1
      %p326 = por %p324, %p325
      %p327 = scmp.ne.s32.totalorder %s316, %s317
      %p328 = scmp.eq.s32.totalorder %s32, 0
      %p329 = por %p327, %p328
      %p330 = scmp.ne.s32.totalorder %s316, %s317
      %p331 = scmp.eq.s32.totalorder %s33, 1
      %p332 = por %p330, %p331
      %p334 = scmp.ne.s32.totalorder %s317, %s333
      %p335 = scmp.eq.s32.totalorder %s33, 0
      %p336 = por %p334, %p335
      %s337 = ssub.s32 %s27, %s34
      %p338 = scmp.eq.s32.totalorder %s337, 0
      %s340 = sadd.s32 %s339, 1
      %s341 = scalar_select %p338, %s339, %s340
      %p344 = pneg %p338
      %p345 = scmp.eq.s32.totalorder %s27, 1
      %p346 = por %p344, %p345
      %p347 = scmp.ne.s32.totalorder %s339, %s342
      %p348 = scmp.eq.s32.totalorder %s27, 0
      %p349 = por %p347, %p348
      %p350 = scmp.ne.s32.totalorder %s339, %s342
      %p351 = scmp.eq.s32.totalorder %s32, 1
      %p352 = por %p350, %p351
      %p353 = scmp.ne.s32.totalorder %s342, %s343
      %p354 = scmp.eq.s32.totalorder %s32, 0
      %p355 = por %p353, %p354
      %p356 = scmp.ne.s32.totalorder %s342, %s343
      %p357 = scmp.eq.s32.totalorder %s33, 1
      %p358 = por %p356, %p357
      %p360 = scmp.ne.s32.totalorder %s343, %s359
      %p361 = scmp.eq.s32.totalorder %s33, 0
      %p362 = por %p360, %p361
      %s363 = ssub.s32 %s27, %s34
      %p364 = scmp.eq.s32.totalorder %s363, 0
      %s366 = sadd.s32 %s365, 1
      %s367 = scalar_select %p364, %s365, %s366
      %p370 = pneg %p364
      %p371 = scmp.eq.s32.totalorder %s27, 1
      %p372 = por %p370, %p371
      %p373 = scmp.ne.s32.totalorder %s365, %s368
      %p374 = scmp.eq.s32.totalorder %s27, 0
      %p375 = por %p373, %p374
      %p376 = scmp.ne.s32.totalorder %s365, %s368
      %p377 = scmp.eq.s32.totalorder %s32, 1
      %p378 = por %p376, %p377
      %p379 = scmp.ne.s32.totalorder %s368, %s369
      %p380 = scmp.eq.s32.totalorder %s32, 0
      %p381 = por %p379, %p380
      %p382 = scmp.ne.s32.totalorder %s368, %s369
      %p383 = scmp.eq.s32.totalorder %s33, 1
      %p384 = por %p382, %p383
      %p386 = scmp.ne.s32.totalorder %s369, %s385
      %p387 = scmp.eq.s32.totalorder %s33, 0
      %p388 = por %p386, %p387
      %s390 = sadd.s32 %s389, 1
      %p393 = scmp.eq.s32.totalorder %s27, 1
      %p394 = scmp.ne.s32.totalorder %s389, %s391
      %p395 = scmp.eq.s32.totalorder %s27, 0
      %p396 = por %p394, %p395
      %p397 = scmp.ne.s32.totalorder %s389, %s391
      %p398 = scmp.eq.s32.totalorder %s32, 1
      %p399 = por %p397, %p398
      %p400 = scmp.ne.s32.totalorder %s391, %s392
      %p401 = scmp.eq.s32.totalorder %s32, 0
      %p402 = por %p400, %p401
      %p403 = scmp.ne.s32.totalorder %s391, %s392
      %p404 = scmp.eq.s32.totalorder %s33, 1
      %p405 = por %p403, %p404
      %p407 = scmp.ne.s32.totalorder %s392, %s406
      %p408 = scmp.eq.s32.totalorder %s33, 0
      %p409 = por %p407, %p408
      %s411 = sadd.s32 %s410, 1
      %p414 = scmp.eq.s32.totalorder %s27, 1
      %p415 = scmp.ne.s32.totalorder %s410, %s412
      %p416 = scmp.eq.s32.totalorder %s27, 0
      %p417 = por %p415, %p416
      %p418 = scmp.ne.s32.totalorder %s410, %s412
      %p419 = scmp.eq.s32.totalorder %s32, 1
      %p420 = por %p418, %p419
      %p421 = scmp.ne.s32.totalorder %s412, %s413
      %p422 = scmp.eq.s32.totalorder %s32, 0
      %p423 = por %p421, %p422
      %p424 = scmp.ne.s32.totalorder %s412, %s413
      %p425 = scmp.eq.s32.totalorder %s33, 1
      %p426 = por %p424, %p425
      %p428 = scmp.ne.s32.totalorder %s413, %s427
      %p429 = scmp.eq.s32.totalorder %s33, 0
      %p430 = por %p428, %p429
      %s432 = sadd.s32 %s431, 1
      %p435 = scmp.eq.s32.totalorder %s27, 1
      %p436 = scmp.ne.s32.totalorder %s431, %s433
      %p437 = scmp.eq.s32.totalorder %s27, 0
      %p438 = por %p436, %p437
      %p439 = scmp.ne.s32.totalorder %s431, %s433
      %p440 = scmp.eq.s32.totalorder %s32, 1
      %p441 = por %p439, %p440
      %p442 = scmp.ne.s32.totalorder %s433, %s434
      %p443 = scmp.eq.s32.totalorder %s32, 0
      %p444 = por %p442, %p443
      %p445 = scmp.ne.s32.totalorder %s433, %s434
      %p446 = scmp.eq.s32.totalorder %s33, 1
      %p447 = por %p445, %p446
      %p449 = scmp.ne.s32.totalorder %s434, %s448
      %p450 = scmp.eq.s32.totalorder %s33, 0
      %p451 = por %p449, %p450
      %p452 = scmp.le.s32.totalorder 1, %s27
      %p453 = scmp.lt.s32.totalorder %s27, 3
      %p454 = pnand %p452, %p453
      %p455 = pneg %p454
      // Predicated region
      $region9: #{tpu_custom_call.1} parent=5 // pred_check
        _
      $region10: #{tpu_custom_call.1} parent=5 // pred_check_branch
        %457 = sbr.rel (%p454) target = $region12
      $region11: #{tpu_custom_call.1} parent=5 // pred_region
        %s458 = ssub.s32 %s27, 1
        // Predicated region
        $region13: #{tpu_custom_call.1} parent=11 // pred_check
          %p459 = pneg %p48
        $region14: #{tpu_custom_call.1} parent=11 // pred_check_branch
          %461 = sbr.rel (%p459) target = $region16
        $region15: #{tpu_custom_call.1} parent=11 // pred_region
          %s463 = ssub.s32 256, 256
          %464 = vsyncadd [#allocation4], %s463
          %s465 = sshll.u32 [#allocation3], 4
          %s466 = int_to_ptr.vmem [resolvable:$true] %s465
          %471 = dma.hbm_to_vmem [thread:$0]  %s0, 256, %s466, [#allocation4], 128, 128, 8
        $region16: #{tpu_custom_call.1} parent=11 // pred_fallthru
          _
        // Predicated region
        $region17: #{tpu_custom_call.1} parent=11 // pred_check
          %p472 = pneg %p69
        $region18: #{tpu_custom_call.1} parent=11 // pred_check_branch
          %474 = sbr.rel (%p472) target = $region20
        $region19: #{tpu_custom_call.1} parent=11 // pred_region
          _
        $region20: #{tpu_custom_call.1} parent=11 // pred_fallthru
          _
        // Predicated region
        $region21: #{tpu_custom_call.1} parent=11 // pred_check
          %p475 = pneg %p402
        $region22: #{tpu_custom_call.1} parent=11 // pred_check_branch
          %477 = sbr.rel (%p475) target = $region24
        $region23: #{tpu_custom_call.1} parent=11 // pred_region
          _
        $region24: #{tpu_custom_call.1} parent=11 // pred_fallthru
          _
        // Predicated region
        $region25: #{tpu_custom_call.1} parent=11 // pred_check
          %p478 = pneg %p423
        $region26: #{tpu_custom_call.1} parent=11 // pred_check_branch
          %480 = sbr.rel (%p478) target = $region28
        $region27: #{tpu_custom_call.1} parent=11 // pred_region
          _
        $region28: #{tpu_custom_call.1} parent=11 // pred_fallthru
          _
      $region12: #{tpu_custom_call.1} parent=5 // pred_fallthru
        _
      %p481 = scmp.lt.s32.totalorder %s27, 2
      // Predicated region
      $region29: #{tpu_custom_call.1} parent=5 // pred_check
        %p482 = pneg %p481
      $region30: #{tpu_custom_call.1} parent=5 // pred_check_branch
        %484 = sbr.rel (%p482) target = $region32
      $region31: #{tpu_custom_call.1} parent=5 // pred_region
        // Predicated region
        $region33: #{tpu_custom_call.1} parent=31 // pred_check
          %p485 = pneg %p89
        $region34: #{tpu_custom_call.1} parent=31 // pred_check_branch
          %487 = sbr.rel (%p485) target = $region36
        $region35: #{tpu_custom_call.1} parent=31 // pred_region
          %p488 = scmp.lt.s32.totalorder %s27, 1
          %s489 = scalar_select %p488, %s27, 1
          %s490 = scalar_lea.vmem %s2, %s489
        $region36: #{tpu_custom_call.1} parent=31 // pred_fallthru
          _
        // Predicated region
        $region37: #{tpu_custom_call.1} parent=31 // pred_check
          %p491 = pneg %p115
        $region38: #{tpu_custom_call.1} parent=31 // pred_check_branch
          %493 = sbr.rel (%p491) target = $region40
        $region39: #{tpu_custom_call.1} parent=31 // pred_region
          %p494 = scmp.lt.s32.totalorder %s27, 1
          %s495 = scalar_select %p494, %s27, 1
          %s496 = scalar_lea.vmem %s3, %s495
        $region40: #{tpu_custom_call.1} parent=31 // pred_fallthru
          _
        // Predicated region
        $region41: #{tpu_custom_call.1} parent=31 // pred_check
          %p497 = pneg %p141
        $region42: #{tpu_custom_call.1} parent=31 // pred_check_branch
          %499 = sbr.rel (%p497) target = $region44
        $region43: #{tpu_custom_call.1} parent=31 // pred_region
          %p500 = scmp.lt.s32.totalorder %s27, 1
          %s501 = scalar_select %p500, %s27, 1
          %s502 = smul.addr %s501, 4
          %s503 = smul.addr %s502, 4
          %s504 = scalar_lea.vmem %s4, %s503
        $region44: #{tpu_custom_call.1} parent=31 // pred_fallthru
          _
        // Predicated region
        $region45: #{tpu_custom_call.1} parent=31 // pred_check
          %p505 = pneg %p167
        $region46: #{tpu_custom_call.1} parent=31 // pred_check_branch
          %507 = sbr.rel (%p505) target = $region48
        $region47: #{tpu_custom_call.1} parent=31 // pred_region
          %p508 = scmp.lt.s32.totalorder %s27, 1
          %s509 = scalar_select %p508, %s27, 1
          %s510 = scalar_lea.vmem %s5, %s509
        $region48: #{tpu_custom_call.1} parent=31 // pred_fallthru
          _
        // Predicated region
        $region49: #{tpu_custom_call.1} parent=31 // pred_check
          %p511 = pneg %p193
        $region50: #{tpu_custom_call.1} parent=31 // pred_check_branch
          %513 = sbr.rel (%p511) target = $region52
        $region51: #{tpu_custom_call.1} parent=31 // pred_region
          %p514 = scmp.lt.s32.totalorder %s27, 1
          %s515 = scalar_select %p514, %s27, 1
          %s516 = smul.addr %s515, 4
          %s517 = smul.addr %s516, 4
          %s518 = scalar_lea.vmem %s6, %s517
        $region52: #{tpu_custom_call.1} parent=31 // pred_fallthru
          _
        // Predicated region
        $region53: #{tpu_custom_call.1} parent=31 // pred_check
          %p519 = pneg %p219
        $region54: #{tpu_custom_call.1} parent=31 // pred_check_branch
          %521 = sbr.rel (%p519) target = $region56
        $region55: #{tpu_custom_call.1} parent=31 // pred_region
          %p522 = scmp.lt.s32.totalorder %s27, 1
          %s523 = scalar_select %p522, %s27, 1
          %s524 = scalar_lea.vmem %s7, %s523
        $region56: #{tpu_custom_call.1} parent=31 // pred_fallthru
          _
        // Predicated region
        $region57: #{tpu_custom_call.1} parent=31 // pred_check
          %p525 = pneg %p245
        $region58: #{tpu_custom_call.1} parent=31 // pred_check_branch
          %527 = sbr.rel (%p525) target = $region60
        $region59: #{tpu_custom_call.1} parent=31 // pred_region
          %p528 = scmp.lt.s32.totalorder %s27, 1
          %s529 = scalar_select %p528, %s27, 1
          %s530 = scalar_lea.vmem %s8, %s529
        $region60: #{tpu_custom_call.1} parent=31 // pred_fallthru
          _
        // Predicated region
        $region61: #{tpu_custom_call.1} parent=31 // pred_check
          %p531 = pneg %p271
        $region62: #{tpu_custom_call.1} parent=31 // pred_check_branch
          %533 = sbr.rel (%p531) target = $region64
        $region63: #{tpu_custom_call.1} parent=31 // pred_region
          %s534 = sand.u32 %s27, 1
          %s535 = scalar_lea.sflag [#allocation7], %s534
          %s536 = sand.u32 %s261, 1
          %s537 = scalar_lea.vmem [#allocation6], %s536
          %s539 = ssub.s32 16, 16
          %540 = vsyncadd %s535, %s539
          %s541 = smul.addr %s27, 16
          %s542 = scalar_lea.hbm %s9, %s541
          %s544 = sshll.u32 %s537, 4
          %s545 = int_to_ptr.vmem [resolvable:$true] %s544
          %547 = dma.hbm_to_vmem [thread:$0]  %s542, 16, %s545, %s535
        $region64: #{tpu_custom_call.1} parent=31 // pred_fallthru
          _
        // Predicated region
        $region65: #{tpu_custom_call.1} parent=31 // pred_check
          %p548 = pneg %p297
        $region66: #{tpu_custom_call.1} parent=31 // pred_check_branch
          %550 = sbr.rel (%p548) target = $region68
        $region67: #{tpu_custom_call.1} parent=31 // pred_region
          %p551 = scmp.lt.s32.totalorder %s27, 1
          %s552 = scalar_select %p551, %s27, 1
          %s553 = smul.addr %s552, 4
          %s554 = smul.addr %s553, 4
          %s555 = scalar_lea.vmem %s10, %s554
        $region68: #{tpu_custom_call.1} parent=31 // pred_fallthru
          _
        // Predicated region
        $region69: #{tpu_custom_call.1} parent=31 // pred_check
          %p556 = pneg %p323
        $region70: #{tpu_custom_call.1} parent=31 // pred_check_branch
          %558 = sbr.rel (%p556) target = $region72
        $region71: #{tpu_custom_call.1} parent=31 // pred_region
          %s559 = sand.u32 %s27, 1
          %s560 = scalar_lea.sflag [#allocation7], %s559
          %s561 = sand.u32 %s313, 1
          %s562 = scalar_lea.vmem [#allocation8], %s561
          %s564 = ssub.s32 16, 16
          %565 = vsyncadd %s560, %s564
          %s566 = smul.addr %s27, 16
          %s567 = scalar_lea.hbm %s11, %s566
          %s569 = sshll.u32 %s562, 4
          %s570 = int_to_ptr.vmem [resolvable:$true] %s569
          %572 = dma.hbm_to_vmem [thread:$0]  %s567, 16, %s570, %s560
        $region72: #{tpu_custom_call.1} parent=31 // pred_fallthru
          _
        // Predicated region
        $region73: #{tpu_custom_call.1} parent=31 // pred_check
          %p573 = pneg %p349
        $region74: #{tpu_custom_call.1} parent=31 // pred_check_branch
          %575 = sbr.rel (%p573) target = $region76
        $region75: #{tpu_custom_call.1} parent=31 // pred_region
          %p576 = scmp.lt.s32.totalorder %s27, 1
          %s577 = scalar_select %p576, %s27, 1
          %s578 = smul.addr %s577, 8
          %s579 = smul.addr %s578, 4
          %s580 = scalar_lea.vmem %s12, %s579
        $region76: #{tpu_custom_call.1} parent=31 // pred_fallthru
          _
        // Predicated region
        $region77: #{tpu_custom_call.1} parent=31 // pred_check
          %p581 = pneg %p375
        $region78: #{tpu_custom_call.1} parent=31 // pred_check_branch
          %583 = sbr.rel (%p581) target = $region80
        $region79: #{tpu_custom_call.1} parent=31 // pred_region
          %p584 = scmp.lt.s32.totalorder %s27, 1
          %s585 = scalar_select %p584, %s27, 1
          %s586 = scalar_lea.vmem %s13, %s585
        $region80: #{tpu_custom_call.1} parent=31 // pred_fallthru
          _
      $region32: #{tpu_custom_call.1} parent=5 // pred_fallthru
        _
      %p587 = scmp.le.s32.totalorder 1, %s27
      %p588 = scmp.lt.s32.totalorder %s27, 3
      %p589 = pnand %p587, %p588
      %p590 = pneg %p589
      // Predicated region
      $region81: #{tpu_custom_call.1} parent=5 // pred_check
        _
      $region82: #{tpu_custom_call.1} parent=5 // pred_check_branch
        %592 = sbr.rel (%p589) target = $region84
      $region83: #{tpu_custom_call.1} parent=5 // pred_region
        %s593 = ssub.s32 %s27, 1
        // Predicated region
        $region85: #{tpu_custom_call.1} parent=83 // pred_check
          %p594 = pneg %p48
        $region86: #{tpu_custom_call.1} parent=83 // pred_check_branch
          %596 = sbr.rel (%p594) target = $region88
        $region87: #{tpu_custom_call.1} parent=83 // pred_region
          %597 = dma.done [#allocation4], 256
        $region88: #{tpu_custom_call.1} parent=83 // pred_fallthru
          _
        %s598 = sand.u32 %s32, 1
        %s599 = scalar_lea.sflag [#allocation7], %s598
        %s600 = sand.u32 %s264, 1
        %s601 = scalar_lea.vmem [#allocation6], %s600
        // Predicated region
        $region89: #{tpu_custom_call.1} parent=83 // pred_check
          %p602 = pneg %p277
        $region90: #{tpu_custom_call.1} parent=83 // pred_check_branch
          %604 = sbr.rel (%p602) target = $region92
        $region91: #{tpu_custom_call.1} parent=83 // pred_region
          %605 = dma.done %s599, 16
        $region92: #{tpu_custom_call.1} parent=83 // pred_fallthru
          _
        %s606 = sand.u32 %s32, 1
        %s607 = scalar_lea.sflag [#allocation7], %s606
        %s608 = sand.u32 %s316, 1
        %s609 = scalar_lea.vmem [#allocation8], %s608
        // Predicated region
        $region93: #{tpu_custom_call.1} parent=83 // pred_check
          %p610 = pneg %p329
        $region94: #{tpu_custom_call.1} parent=83 // pred_check_branch
          %612 = sbr.rel (%p610) target = $region96
        $region95: #{tpu_custom_call.1} parent=83 // pred_region
          %613 = dma.done %s607, 16
        $region96: #{tpu_custom_call.1} parent=83 // pred_fallthru
          _
        %p614 = pneg %p48
        %p615 = pneg %p45
        %p616 = pneg %p69
        %p617 = pneg %p66
        %p618 = scmp.lt.s32.totalorder %s32, 1
        %s619 = scalar_select %p618, %s32, 1
        %s620 = scalar_lea.vmem %s2, %s619
        %p621 = pneg %p95
        %p622 = pneg %p92
        %p623 = scmp.lt.s32.totalorder %s32, 1
        %s624 = scalar_select %p623, %s32, 1
        %s625 = scalar_lea.vmem %s3, %s624
        %p626 = pneg %p121
        %p627 = pneg %p118
        %p628 = scmp.lt.s32.totalorder %s32, 1
        %s629 = scalar_select %p628, %s32, 1
        %s630 = smul.addr %s629, 4
        %s631 = smul.addr %s630, 4
        %s632 = scalar_lea.vmem %s4, %s631
        %p633 = pneg %p147
        %p634 = pneg %p144
        %p635 = scmp.lt.s32.totalorder %s32, 1
        %s636 = scalar_select %p635, %s32, 1
        %s637 = scalar_lea.vmem %s5, %s636
        %p638 = pneg %p173
        %p639 = pneg %p170
        %p640 = scmp.lt.s32.totalorder %s32, 1
        %s641 = scalar_select %p640, %s32, 1
        %s642 = smul.addr %s641, 4
        %s643 = smul.addr %s642, 4
        %s644 = scalar_lea.vmem %s6, %s643
        %p645 = pneg %p199
        %p646 = pneg %p196
        %p647 = scmp.lt.s32.totalorder %s32, 1
        %s648 = scalar_select %p647, %s32, 1
        %s649 = scalar_lea.vmem %s7, %s648
        %p650 = pneg %p225
        %p651 = pneg %p222
        %p652 = scmp.lt.s32.totalorder %s32, 1
        %s653 = scalar_select %p652, %s32, 1
        %s654 = scalar_lea.vmem %s8, %s653
        %p655 = pneg %p251
        %p656 = pneg %p248
        %s657 = sand.u32 %s32, 1
        %s658 = scalar_lea.sflag [#allocation7], %s657
        %s659 = sand.u32 %s264, 1
        %s660 = scalar_lea.vmem [#allocation6], %s659
        %p661 = pneg %p277
        %p662 = pneg %p274
        %p663 = scmp.lt.s32.totalorder %s32, 1
        %s664 = scalar_select %p663, %s32, 1
        %s665 = smul.addr %s664, 4
        %s666 = smul.addr %s665, 4
        %s667 = scalar_lea.vmem %s10, %s666
        %p668 = pneg %p303
        %p669 = pneg %p300
        %s670 = sand.u32 %s32, 1
        %s671 = scalar_lea.sflag [#allocation7], %s670
        %s672 = sand.u32 %s316, 1
        %s673 = scalar_lea.vmem [#allocation8], %s672
        %p674 = pneg %p329
        %p675 = pneg %p326
        %p676 = scmp.lt.s32.totalorder %s32, 1
        %s677 = scalar_select %p676, %s32, 1
        %s678 = smul.addr %s677, 8
        %s679 = smul.addr %s678, 4
        %s680 = scalar_lea.vmem %s12, %s679
        %p681 = pneg %p355
        %p682 = pneg %p352
        %p683 = scmp.lt.s32.totalorder %s32, 1
        %s684 = scalar_select %p683, %s32, 1
        %s685 = scalar_lea.vmem %s13, %s684
        %p686 = pneg %p381
        %p687 = pneg %p378
        %p688 = pneg %p402
        %p689 = pneg %p399
        %p690 = pneg %p423
        %p691 = pneg %p420
        %p692 = pneg %p444
        %p693 = pneg %p441
        %p694 = scmp.lt.s32.totalorder %s32, 1
        %s695 = scalar_select %p694, %s32, 1
        %s696 = scalar_lea.vmem %s2, %s695
        %p697 = scmp.lt.s32.totalorder %s32, 1
        %s698 = scalar_select %p697, %s32, 1
        %s699 = scalar_lea.vmem %s3, %s698
        %p700 = scmp.lt.s32.totalorder %s32, 1
        %s701 = scalar_select %p700, %s32, 1
        %s702 = smul.addr %s701, 4
        %s703 = smul.addr %s702, 4
        %s704 = scalar_lea.vmem %s4, %s703
        %p705 = scmp.lt.s32.totalorder %s32, 1
        %s706 = scalar_select %p705, %s32, 1
        %s707 = scalar_lea.vmem %s5, %s706
        %p708 = scmp.lt.s32.totalorder %s32, 1
        %s709 = scalar_select %p708, %s32, 1
        %s710 = smul.addr %s709, 4
        %s711 = smul.addr %s710, 4
        %s712 = scalar_lea.vmem %s6, %s711
        %p713 = scmp.lt.s32.totalorder %s32, 1
        %s714 = scalar_select %p713, %s32, 1
        %s715 = scalar_lea.vmem %s7, %s714
        %p716 = scmp.lt.s32.totalorder %s32, 1
        %s717 = scalar_select %p716, %s32, 1
        %s718 = scalar_lea.vmem %s8, %s717
        %p719 = scmp.lt.s32.totalorder %s32, 1
        %s720 = scalar_select %p719, %s32, 1
        %s721 = smul.addr %s720, 4
        %s722 = smul.addr %s721, 4
        %s723 = scalar_lea.vmem %s10, %s722
        %p724 = scmp.lt.s32.totalorder %s32, 1
        %s725 = scalar_select %p724, %s32, 1
        %s726 = smul.addr %s725, 8
        %s727 = smul.addr %s726, 4
        %s728 = scalar_lea.vmem %s12, %s727
        %p729 = scmp.lt.s32.totalorder %s32, 1
        %s730 = scalar_select %p729, %s32, 1
        %s731 = scalar_lea.vmem %s13, %s730
        %p733 = scmp.eq.s32.totalorder %s32, 0
        // Predicated region
        $region97: #{tpu_custom_call.1} parent=83 // pred_check
          %p734 = pneg %p733
        $region98: #{tpu_custom_call.1} parent=83 // pred_check_branch
          %736 = sbr.rel (%p734) target = $region100
        $region99: #{tpu_custom_call.1} parent=83 // pred_region
          %v737 = vld [vmem:[#allocation3] sm:$0xff]
          %v738 = vld [vmem:[#allocation3 + $0x8] sm:$0xff]
          %vm739 = vcmask 261120
          %740 = vst.msk [vmem:[#allocation2] sm:$0xff] %vm739, %v737
          %741 = vst.msk [vmem:[#allocation2 + $0x8] sm:$0xff] %vm739, %v738
        $region100: #{tpu_custom_call.1} parent=83 // pred_fallthru
          _
        %v742 = vld [vmem:[#allocation2] sm:$0xff]
        %v743 = vld [vmem:[#allocation2 + $0x8] sm:$0xff]
        %v744 = vld [vmem:[%s1] sm:$0x1]
        %v745 = vld [vmem:[%s1 + $0x1] sm:$0x1]
        %v746 = vld [vmem:[%s696] sm:$0x1]
        %v747 = vld [vmem:[%s699] sm:$0x1]
        %vm748 = vcmask 261120
        %v749 = vsel %vm748, %v742, 0.0
        %750 = vadd.xlane.f32.xlu0 %v749
        %v751 = vpop.xlane.xlu0 %750
        %v752 = vsel %vm748, %v743, 0.0
        %753 = vadd.xlane.f32.xlu0 %v752
        %v754 = vpop.xlane.xlu0 %753
        %v755 = vrcp.pop 32.0
        %v756 = vmul.f32 %v751, %v755
        %v757 = vmul.f32 %v754, %v755
        %v758 = vsub.f32 %v742, %v756
        %v759 = vsub.f32 %v743, %v757
        %v760 = vmul.f32 %v758, %v758
        %v761 = vmul.f32 %v759, %v759
        %v762 = vsel %vm748, %v760, 0.0
        %763 = vadd.xlane.f32.xlu0 %v762
        %v764 = vpop.xlane.xlu0 %763
        %v765 = vsel %vm748, %v761, 0.0
        %766 = vadd.xlane.f32.xlu0 %v765
        %v767 = vpop.xlane.xlu0 %766
        %v768 = vmul.f32 %v764, 0.032258064
        %v769 = vmul.f32 %v767, 0.032258064
        %v771 = vlaneseq
        %v772 = vshrl.u32 %v771, 7
        %v773 = vsub.s32 0, %v772
        %v774 = vrot.slane %v746, %v773
        %v776 = vmul.f32 %v774, %v758
        %v777 = vmul.f32 %v774, %v759
        %v778 = vrsqrt.pop %v768
        %v779 = vmul.f32 %v768, %v778
        %vm780 = vcmp.eq.f32.partialorder %v768, inf
        %v781 = vsel %vm780, %v768, %v779
        %vm782 = vcmp.eq.f32.partialorder %v768, 0.0
        %v783 = vand.u32 %v768, 2147483648
        %v784 = vsel %vm782, %v783, %v781
        %v785 = vrsqrt.pop %v769
        %v786 = vmul.f32 %v769, %v785
        %vm787 = vcmp.eq.f32.partialorder %v769, inf
        %v788 = vsel %vm787, %v769, %v786
        %vm789 = vcmp.eq.f32.partialorder %v769, 0.0
        %v790 = vand.u32 %v769, 2147483648
        %v791 = vsel %vm789, %v790, %v788
        %v792 = vadd.f32 %v784, 1e-06
        %v793 = vadd.f32 %v791, 1e-06
        %v794 = vrcp.pop %v792
        %v795 = vmul.f32 %v776, %v794
        %v796 = vrcp.pop %v793
        %v797 = vmul.f32 %v777, %v796
        %v799 = vlaneseq
        %v800 = vshrl.u32 %v799, 7
        %v801 = vsub.s32 0, %v800
        %v802 = vrot.slane %v747, %v801
        %v804 = vadd.f32 %v795, %v802
        %v805 = vadd.f32 %v797, %v802
        %v806 = vpack.c.bf16 %v805, %v804
        %v807 = vld [vmem:[%s704] sm:$0xf]
        %v808 = vld [vmem:[%s704 + $0x4] sm:$0xf]
        %v809 = vld [vmem:[%s704 + $0x8] sm:$0xf]
        %v810 = vld [vmem:[%s704 + $0xc] sm:$0xf]
        %v811 = vld [vmem:[%s707] sm:$0x1]
        %v813 = vlaneseq
        %v814 = vshrl.u32 %v813, 7
        %v815 = vsub.s32 0, %v814
        %v816 = vrot.slane %v811, %v815
        %v822 = vunpack.c.l.b16 %v807
        %v823 = vunpack.c.l.b16 %v808
        %v824 = vunpack.c.l.b16 %v809
        %v825 = vunpack.c.l.b16 %v810
        %v826 = vpack.c.b16 %v823, %v822
        %v827 = vpack.c.b16 %v825, %v824
        %v831 = vsel %vm748, %v806, 0
        %833 = vmatprep.subr.bf16.mxu0 0
        %834 = vmatpush1.bf16.msra.mxu0 %v826
        %835 = vmatprep.subr.bf16.mxu0 0
        %836 = vmatpush1.bf16.msra.mxu0 %v827
        %837 = vmatprep.subr.bf16.mxu0 0
        %838 = vmatpush1.bf16.msra.mxu0 0
        %839 = vmatprep.subr.bf16.mxu0 0
        %840 = vmatpush1.bf16.msra.mxu0 0
        %841 = vmatprep.subr.bf16.mxu0 0
        %842 = vmatpush1.bf16.msra.mxu0 0
        %843 = vmatprep.subr.bf16.mxu0 0
        %844 = vmatpush1.bf16.msra.mxu0 0
        %845 = vmatprep.subr.bf16.mxu0 0
        %846 = vmatpush1.bf16.msra.mxu0 0
        %847 = vmatprep.subr.bf16.mxu0 0
        %848 = vmatpush1.bf16.msra.mxu0 0
        %849 = vmatprep.subr.bf16.mxu0 0
        %850 = vmatpush1.bf16.msra.mxu0 0
        %851 = vmatprep.subr.bf16.mxu0 0
        %852 = vmatpush1.bf16.msra.mxu0 0
        %853 = vmatprep.subr.bf16.mxu0 0
        %854 = vmatpush1.bf16.msra.mxu0 0
        %855 = vmatprep.subr.bf16.mxu0 0
        %856 = vmatpush1.bf16.msra.mxu0 0
        %857 = vmatprep.subr.bf16.mxu0 0
        %858 = vmatpush1.bf16.msra.mxu0 0
        %859 = vmatprep.subr.bf16.mxu0 0
        %860 = vmatpush1.bf16.msra.mxu0 0
        %861 = vmatprep.subr.bf16.mxu0 0
        %862 = vmatpush1.bf16.msra.mxu0 0
        %863 = vmatprep.subr.bf16.mxu0 0
        %864 = vmatpush1.bf16.msra.mxu0 0
        %865 = vmatprep.mubr.bf16.mxu0 0
        %866 = vmatmul.mubr.bf16.gmra.mrb[0].mxu0 %v831
        %v867 = vpop.f32.mrb[0].mxu0
        %v868 = vadd.f32 %v816, %v867
        %v869 = vpop.f32.mrb[0].mxu0
        %v870 = vpop.f32.mrb[0].mxu0
        %v871 = vadd.f32 %v816, %v870
        %v872 = vpop.f32.mrb[0].mxu0
        %873 = vdwg.mxu0
        %v874 = vpack.c.bf16 %v868, %v868
        %v875 = vpack.c.bf16 %v871, %v871
        %877 = vrot.lane.b32.xlu0 %v874, 96
        %v878 = vpop.permute.xlu0 %877
        %vm879 = vcmask 64512
        %v881 = vsel %vm879, %v874, 0
        %v884 = vsel %vm879, %v878, 0
        %886 = vmatprep.subr.bf16.mxu0 0
        %887 = vmatpush1.bf16.xpose.msra.mxu0 %v884
        %888 = vmatprep.subr.bf16.mxu0 0
        %889 = vmatpush1.bf16.xpose.msra.mxu0 0
        %890 = vmatprep.subr.bf16.mxu0 0
        %891 = vmatpush1.bf16.xpose.msra.mxu0 0
        %892 = vmatprep.subr.bf16.mxu0 0
        %893 = vmatpush1.bf16.xpose.msra.mxu0 0
        %894 = vmatprep.subr.bf16.mxu0 0
        %895 = vmatpush1.bf16.xpose.msra.mxu0 0
        %896 = vmatprep.subr.bf16.mxu0 0
        %897 = vmatpush1.bf16.xpose.msra.mxu0 0
        %898 = vmatprep.subr.bf16.mxu0 0
        %899 = vmatpush1.bf16.xpose.msra.mxu0 0
        %900 = vmatprep.subr.bf16.mxu0 0
        %901 = vmatpush1.bf16.xpose.msra.mxu0 0
        %902 = vmatprep.subr.bf16.mxu0 0
        %903 = vmatpush1.bf16.xpose.msra.mxu0 0
        %904 = vmatprep.subr.bf16.mxu0 0
        %905 = vmatpush1.bf16.xpose.msra.mxu0 0
        %906 = vmatprep.subr.bf16.mxu0 0
        %907 = vmatpush1.bf16.xpose.msra.mxu0 0
        %908 = vmatprep.subr.bf16.mxu0 0
        %909 = vmatpush1.bf16.xpose.msra.mxu0 0
        %910 = vmatprep.subr.bf16.mxu0 0
        %911 = vmatpush1.bf16.xpose.msra.mxu0 0
        %912 = vmatprep.subr.bf16.mxu0 0
        %913 = vmatpush1.bf16.xpose.msra.mxu0 0
        %914 = vmatprep.subr.bf16.mxu0 0
        %915 = vmatpush1.bf16.xpose.msra.mxu0 0
        %916 = vmatprep.subr.bf16.mxu0 0
        %917 = vmatpush1.bf16.xpose.msra.mxu0 0
        %918 = vmatprep.mubr.bf16.mxu0 0
        %919 = vmatmul.mubr.bf16.gmra.mrb[0].mxu0 %v881
        %v920 = vpop.f32.mrb[0].mxu0
        %v921 = vadd.f32 0.0, %v920
        %v922 = vpop.f32.mrb[0].mxu0
        %v923 = vpop.f32.mrb[0].mxu0
        %v924 = vpop.f32.mrb[0].mxu0
        %925 = vdwg.mxu0
        %927 = vrot.lane.b32.xlu0 %v875, 96
        %v928 = vpop.permute.xlu0 %927
        %v930 = vsel %vm879, %v875, 0
        %v933 = vsel %vm879, %v928, 0
        %935 = vmatprep.subr.bf16.mxu0 0
        %936 = vmatpush1.bf16.xpose.msra.mxu0 %v933
        %937 = vmatprep.subr.bf16.mxu0 0
        %938 = vmatpush1.bf16.xpose.msra.mxu0 0
        %939 = vmatprep.subr.bf16.mxu0 0
        %940 = vmatpush1.bf16.xpose.msra.mxu0 0
        %941 = vmatprep.subr.bf16.mxu0 0
        %942 = vmatpush1.bf16.xpose.msra.mxu0 0
        %943 = vmatprep.subr.bf16.mxu0 0
        %944 = vmatpush1.bf16.xpose.msra.mxu0 0
        %945 = vmatprep.subr.bf16.mxu0 0
        %946 = vmatpush1.bf16.xpose.msra.mxu0 0
        %947 = vmatprep.subr.bf16.mxu0 0
        %948 = vmatpush1.bf16.xpose.msra.mxu0 0
        %949 = vmatprep.subr.bf16.mxu0 0
        %950 = vmatpush1.bf16.xpose.msra.mxu0 0
        %951 = vmatprep.subr.bf16.mxu0 0
        %952 = vmatpush1.bf16.xpose.msra.mxu0 0
        %953 = vmatprep.subr.bf16.mxu0 0
        %954 = vmatpush1.bf16.xpose.msra.mxu0 0
        %955 = vmatprep.subr.bf16.mxu0 0
        %956 = vmatpush1.bf16.xpose.msra.mxu0 0
        %957 = vmatprep.subr.bf16.mxu0 0
        %958 = vmatpush1.bf16.xpose.msra.mxu0 0
        %959 = vmatprep.subr.bf16.mxu0 0
        %960 = vmatpush1.bf16.xpose.msra.mxu0 0
        %961 = vmatprep.subr.bf16.mxu0 0
        %962 = vmatpush1.bf16.xpose.msra.mxu0 0
        %963 = vmatprep.subr.bf16.mxu0 0
        %964 = vmatpush1.bf16.xpose.msra.mxu0 0
        %965 = vmatprep.subr.bf16.mxu0 0
        %966 = vmatpush1.bf16.xpose.msra.mxu0 0
        %967 = vmatprep.mubr.bf16.mxu0 0
        %968 = vmatmul.mubr.bf16.gmra.mrb[0].mxu0 %v930
        %v969 = vpop.f32.mrb[0].mxu0
        %v970 = vadd.f32 0.0, %v969
        %v971 = vpop.f32.mrb[0].mxu0
        %v972 = vpop.f32.mrb[0].mxu0
        %v973 = vpop.f32.mrb[0].mxu0
        %974 = vdwg.mxu0
        %975 = vrot.lane.b32.xlu0 %v874, 120
        %v976 = vpop.permute.xlu0 %975
        %977 = vrot.lane.b32.xlu0 %v874, 88
        %v978 = vpop.permute.xlu0 %977
        %v980 = vsel %vm879, %v976, 0
        %v983 = vsel %vm879, %v978, 0
        %985 = vmatprep.subr.bf16.mxu0 0
        %986 = vmatpush1.bf16.xpose.msra.mxu0 %v983
        %987 = vmatprep.subr.bf16.mxu0 0
        %988 = vmatpush1.bf16.xpose.msra.mxu0 0
        %989 = vmatprep.subr.bf16.mxu0 0
        %990 = vmatpush1.bf16.xpose.msra.mxu0 0
        %991 = vmatprep.subr.bf16.mxu0 0
        %992 = vmatpush1.bf16.xpose.msra.mxu0 0
        %993 = vmatprep.subr.bf16.mxu0 0
        %994 = vmatpush1.bf16.xpose.msra.mxu0 0
        %995 = vmatprep.subr.bf16.mxu0 0
        %996 = vmatpush1.bf16.xpose.msra.mxu0 0
        %997 = vmatprep.subr.bf16.mxu0 0
        %998 = vmatpush1.bf16.xpose.msra.mxu0 0
        %999 = vmatprep.subr.bf16.mxu0 0
        %1000 = vmatpush1.bf16.xpose.msra.mxu0 0
        %1001 = vmatprep.subr.bf16.mxu0 0
        %1002 = vmatpush1.bf16.xpose.msra.mxu0 0
        %1003 = vmatprep.subr.bf16.mxu0 0
        %1004 = vmatpush1.bf16.xpose.msra.mxu0 0
        %1005 = vmatprep.subr.bf16.mxu0 0
        %1006 = vmatpush1.bf16.xpose.msra.mxu0 0
        %1007 = vmatprep.subr.bf16.mxu0 0
        %1008 = vmatpush1.bf16.xpose.msra.mxu0 0
        %1009 = vmatprep.subr.bf16.mxu0 0
        %1010 = vmatpush1.bf16.xpose.msra.mxu0 0
        %1011 = vmatprep.subr.bf16.mxu0 0
        %1012 = vmatpush1.bf16.xpose.msra.mxu0 0
        %1013 = vmatprep.subr.bf16.mxu0 0
        %1014 = vmatpush1.bf16.xpose.msra.mxu0 0
        %1015 = vmatprep.subr.bf16.mxu0 0
        %1016 = vmatpush1.bf16.xpose.msra.mxu0 0
        %1017 = vmatprep.mubr.bf16.mxu0 0
        %1018 = vmatmul.mubr.bf16.gmra.mrb[0].mxu0 %v980
        %v1019 = vpop.f32.mrb[0].mxu0
        %v1020 = vadd.f32 0.0, %v1019
        %v1021 = vpop.f32.mrb[0].mxu0
        %v1022 = vpop.f32.mrb[0].mxu0
        %v1023 = vpop.f32.mrb[0].mxu0
        %1024 = vdwg.mxu0
        %1025 = vrot.lane.b32.xlu0 %v875, 120
        %v1026 = vpop.permute.xlu0 %1025
        %1027 = vrot.lane.b32.xlu0 %v875, 88
        %v1028 = vpop.permute.xlu0 %1027
        %v1030 = vsel %vm879, %v1026, 0
        %v1033 = vsel %vm879, %v1028, 0
        %1035 = vmatprep.subr.bf16.mxu0 0
        %1036 = vmatpush1.bf16.xpose.msra.mxu0 %v1033
        %1037 = vmatprep.subr.bf16.mxu0 0
        %1038 = vmatpush1.bf16.xpose.msra.mxu0 0
        %1039 = vmatprep.subr.bf16.mxu0 0
        %1040 = vmatpush1.bf16.xpose.msra.mxu0 0
        %1041 = vmatprep.subr.bf16.mxu0 0
        %1042 = vmatpush1.bf16.xpose.msra.mxu0 0
        %1043 = vmatprep.subr.bf16.mxu0 0
        %1044 = vmatpush1.bf16.xpose.msra.mxu0 0
        %1045 = vmatprep.subr.bf16.mxu0 0
        %1046 = vmatpush1.bf16.xpose.msra.mxu0 0
        %1047 = vmatprep.subr.bf16.mxu0 0
        %1048 = vmatpush1.bf16.xpose.msra.mxu0 0
        %1049 = vmatprep.subr.bf16.mxu0 0
        %1050 = vmatpush1.bf16.xpose.msra.mxu0 0
        %1051 = vmatprep.subr.bf16.mxu0 0
        %1052 = vmatpush1.bf16.xpose.msra.mxu0 0
        %1053 = vmatprep.subr.bf16.mxu0 0
        %1054 = vmatpush1.bf16.xpose.msra.mxu0 0
        %1055 = vmatprep.subr.bf16.mxu0 0
        %1056 = vmatpush1.bf16.xpose.msra.mxu0 0
        %1057 = vmatprep.subr.bf16.mxu0 0
        %1058 = vmatpush1.bf16.xpose.msra.mxu0 0
        %1059 = vmatprep.subr.bf16.mxu0 0
        %1060 = vmatpush1.bf16.xpose.msra.mxu0 0
        %1061 = vmatprep.subr.bf16.mxu0 0
        %1062 = vmatpush1.bf16.xpose.msra.mxu0 0
        %1063 = vmatprep.subr.bf16.mxu0 0
        %1064 = vmatpush1.bf16.xpose.msra.mxu0 0
        %1065 = vmatprep.subr.bf16.mxu0 0
        %1066 = vmatpush1.bf16.xpose.msra.mxu0 0
        %1067 = vmatprep.mubr.bf16.mxu0 0
        %1068 = vmatmul.mubr.bf16.gmra.mrb[0].mxu0 %v1030
        %v1069 = vpop.f32.mrb[0].mxu0
        %v1070 = vadd.f32 0.0, %v1069
        %v1071 = vpop.f32.mrb[0].mxu0
        %v1072 = vpop.f32.mrb[0].mxu0
        %v1073 = vpop.f32.mrb[0].mxu0
        %1074 = vdwg.mxu0
        %1075 = vrot.lane.b32.xlu0 %v874, 112
        %v1076 = vpop.permute.xlu0 %1075
        %1077 = vrot.lane.b32.xlu0 %v874, 80
        %v1078 = vpop.permute.xlu0 %1077
        %v1080 = vsel %vm879, %v1076, 0
        %v1083 = vsel %vm879, %v1078, 0
        %1085 = vmatprep.subr.bf16.mxu0 0
        %1086 = vmatpush1.bf16.xpose.msra.mxu0 %v1083
        %1087 = vmatprep.subr.bf16.mxu0 0
        %1088 = vmatpush1.bf16.xpose.msra.mxu0 0
        %1089 = vmatprep.subr.bf16.mxu0 0
        %1090 = vmatpush1.bf16.xpose.msra.mxu0 0
        %1091 = vmatprep.subr.bf16.mxu0 0
        %1092 = vmatpush1.bf16.xpose.msra.mxu0 0
        %1093 = vmatprep.subr.bf16.mxu0 0
        %1094 = vmatpush1.bf16.xpose.msra.mxu0 0
        %1095 = vmatprep.subr.bf16.mxu0 0
        %1096 = vmatpush1.bf16.xpose.msra.mxu0 0
        %1097 = vmatprep.subr.bf16.mxu0 0
        %1098 = vmatpush1.bf16.xpose.msra.mxu0 0
        %1099 = vmatprep.subr.bf16.mxu0 0
        %1100 = vmatpush1.bf16.xpose.msra.mxu0 0
        %1101 = vmatprep.subr.bf16.mxu0 0
        %1102 = vmatpush1.bf16.xpose.msra.mxu0 0
        %1103 = vmatprep.subr.bf16.mxu0 0
        %1104 = vmatpush1.bf16.xpose.msra.mxu0 0
        %1105 = vmatprep.subr.bf16.mxu0 0
        %1106 = vmatpush1.bf16.xpose.msra.mxu0 0
        %1107 = vmatprep.subr.bf16.mxu0 0
        %1108 = vmatpush1.bf16.xpose.msra.mxu0 0
        %1109 = vmatprep.subr.bf16.mxu0 0
        %1110 = vmatpush1.bf16.xpose.msra.mxu0 0
        %1111 = vmatprep.subr.bf16.mxu0 0
        %1112 = vmatpush1.bf16.xpose.msra.mxu0 0
        %1113 = vmatprep.subr.bf16.mxu0 0
        %1114 = vmatpush1.bf16.xpose.msra.mxu0 0
        %1115 = vmatprep.subr.bf16.mxu0 0
        %1116 = vmatpush1.bf16.xpose.msra.mxu0 0
        %1117 = vmatprep.mubr.bf16.mxu0 0
        %1118 = vmatmul.mubr.bf16.gmra.mrb[0].mxu0 %v1080
        %v1119 = vpop.f32.mrb[0].mxu0
        %v1120 = vadd.f32 0.0, %v1119
        %v1121 = vpop.f32.mrb[0].mxu0
        %v1122 = vpop.f32.mrb[0].mxu0
        %v1123 = vpop.f32.mrb[0].mxu0
        %1124 = vdwg.mxu0
        %1125 = vrot.lane.b32.xlu0 %v875, 112
        %v1126 = vpop.permute.xlu0 %1125
        %1127 = vrot.lane.b32.xlu0 %v875, 80
        %v1128 = vpop.permute.xlu0 %1127
        %v1130 = vsel %vm879, %v1126, 0
        %v1133 = vsel %vm879, %v1128, 0
        %1135 = vmatprep.subr.bf16.mxu0 0
        %1136 = vmatpush1.bf16.xpose.msra.mxu0 %v1133
        %1137 = vmatprep.subr.bf16.mxu0 0
        %1138 = vmatpush1.bf16.xpose.msra.mxu0 0
        %1139 = vmatprep.subr.bf16.mxu0 0
        %1140 = vmatpush1.bf16.xpose.msra.mxu0 0
        %1141 = vmatprep.subr.bf16.mxu0 0
        %1142 = vmatpush1.bf16.xpose.msra.mxu0 0
        %1143 = vmatprep.subr.bf16.mxu0 0
        %1144 = vmatpush1.bf16.xpose.msra.mxu0 0
        %1145 = vmatprep.subr.bf16.mxu0 0
        %1146 = vmatpush1.bf16.xpose.msra.mxu0 0
        %1147 = vmatprep.subr.bf16.mxu0 0
        %1148 = vmatpush1.bf16.xpose.msra.mxu0 0
        %1149 = vmatprep.subr.bf16.mxu0 0
        %1150 = vmatpush1.bf16.xpose.msra.mxu0 0
        %1151 = vmatprep.subr.bf16.mxu0 0
        %1152 = vmatpush1.bf16.xpose.msra.mxu0 0
        %1153 = vmatprep.subr.bf16.mxu0 0
        %1154 = vmatpush1.bf16.xpose.msra.mxu0 0
        %1155 = vmatprep.subr.bf16.mxu0 0
        %1156 = vmatpush1.bf16.xpose.msra.mxu0 0
        %1157 = vmatprep.subr.bf16.mxu0 0
        %1158 = vmatpush1.bf16.xpose.msra.mxu0 0
        %1159 = vmatprep.subr.bf16.mxu0 0
        %1160 = vmatpush1.bf16.xpose.msra.mxu0 0
        %1161 = vmatprep.subr.bf16.mxu0 0
        %1162 = vmatpush1.bf16.xpose.msra.mxu0 0
        %1163 = vmatprep.subr.bf16.mxu0 0
        %1164 = vmatpush1.bf16.xpose.msra.mxu0 0
        %1165 = vmatprep.subr.bf16.mxu0 0
        %1166 = vmatpush1.bf16.xpose.msra.mxu0 0
        %1167 = vmatprep.mubr.bf16.mxu0 0
        %1168 = vmatmul.mubr.bf16.gmra.mrb[0].mxu0 %v1130
        %v1169 = vpop.f32.mrb[0].mxu0
        %v1170 = vadd.f32 0.0, %v1169
        %v1171 = vpop.f32.mrb[0].mxu0
        %v1172 = vpop.f32.mrb[0].mxu0
        %v1173 = vpop.f32.mrb[0].mxu0
        %1174 = vdwg.mxu0
        %1175 = vrot.lane.b32.xlu0 %v874, 104
        %v1176 = vpop.permute.xlu0 %1175
        %1177 = vrot.lane.b32.xlu0 %v874, 72
        %v1178 = vpop.permute.xlu0 %1177
        %v1180 = vsel %vm879, %v1176, 0
        %v1183 = vsel %vm879, %v1178, 0
        %1185 = vmatprep.subr.bf16.mxu0 0
        %1186 = vmatpush1.bf16.xpose.msra.mxu0 %v1183
        %1187 = vmatprep.subr.bf16.mxu0 0
        %1188 = vmatpush1.bf16.xpose.msra.mxu0 0
        %1189 = vmatprep.subr.bf16.mxu0 0
        %1190 = vmatpush1.bf16.xpose.msra.mxu0 0
        %1191 = vmatprep.subr.bf16.mxu0 0
        %1192 = vmatpush1.bf16.xpose.msra.mxu0 0
        %1193 = vmatprep.subr.bf16.mxu0 0
        %1194 = vmatpush1.bf16.xpose.msra.mxu0 0
        %1195 = vmatprep.subr.bf16.mxu0 0
        %1196 = vmatpush1.bf16.xpose.msra.mxu0 0
        %1197 = vmatprep.subr.bf16.mxu0 0
        %1198 = vmatpush1.bf16.xpose.msra.mxu0 0
        %1199 = vmatprep.subr.bf16.mxu0 0
        %1200 = vmatpush1.bf16.xpose.msra.mxu0 0
        %1201 = vmatprep.subr.bf16.mxu0 0
        %1202 = vmatpush1.bf16.xpose.msra.mxu0 0
        %1203 = vmatprep.subr.bf16.mxu0 0
        %1204 = vmatpush1.bf16.xpose.msra.mxu0 0
        %1205 = vmatprep.subr.bf16.mxu0 0
        %1206 = vmatpush1.bf16.xpose.msra.mxu0 0
        %1207 = vmatprep.subr.bf16.mxu0 0
        %1208 = vmatpush1.bf16.xpose.msra.mxu0 0
        %1209 = vmatprep.subr.bf16.mxu0 0
        %1210 = vmatpush1.bf16.xpose.msra.mxu0 0
        %1211 = vmatprep.subr.bf16.mxu0 0
        %1212 = vmatpush1.bf16.xpose.msra.mxu0 0
        %1213 = vmatprep.subr.bf16.mxu0 0
        %1214 = vmatpush1.bf16.xpose.msra.mxu0 0
        %1215 = vmatprep.subr.bf16.mxu0 0
        %1216 = vmatpush1.bf16.xpose.msra.mxu0 0
        %1217 = vmatprep.mubr.bf16.mxu0 0
        %1218 = vmatmul.mubr.bf16.gmra.mrb[0].mxu0 %v1180
        %v1219 = vpop.f32.mrb[0].mxu0
        %v1220 = vadd.f32 0.0, %v1219
        %v1221 = vpop.f32.mrb[0].mxu0
        %v1222 = vpop.f32.mrb[0].mxu0
        %v1223 = vpop.f32.mrb[0].mxu0
        %1224 = vdwg.mxu0
        %1225 = vrot.lane.b32.xlu0 %v875, 104
        %v1226 = vpop.permute.xlu0 %1225
        %1227 = vrot.lane.b32.xlu0 %v875, 72
        %v1228 = vpop.permute.xlu0 %1227
        %v1230 = vsel %vm879, %v1226, 0
        %v1233 = vsel %vm879, %v1228, 0
        %1235 = vmatprep.subr.bf16.mxu0 0
        %1236 = vmatpush1.bf16.xpose.msra.mxu0 %v1233
        %1237 = vmatprep.subr.bf16.mxu0 0
        %1238 = vmatpush1.bf16.xpose.msra.mxu0 0
        %1239 = vmatprep.subr.bf16.mxu0 0
        %1240 = vmatpush1.bf16.xpose.msra.mxu0 0
        %1241 = vmatprep.subr.bf16.mxu0 0
        %1242 = vmatpush1.bf16.xpose.msra.mxu0 0
        %1243 = vmatprep.subr.bf16.mxu0 0
        %1244 = vmatpush1.bf16.xpose.msra.mxu0 0
        %1245 = vmatprep.subr.bf16.mxu0 0
        %1246 = vmatpush1.bf16.xpose.msra.mxu0 0
        %1247 = vmatprep.subr.bf16.mxu0 0
        %1248 = vmatpush1.bf16.xpose.msra.mxu0 0
        %1249 = vmatprep.subr.bf16.mxu0 0
        %1250 = vmatpush1.bf16.xpose.msra.mxu0 0
        %1251 = vmatprep.subr.bf16.mxu0 0
        %1252 = vmatpush1.bf16.xpose.msra.mxu0 0
        %1253 = vmatprep.subr.bf16.mxu0 0
        %1254 = vmatpush1.bf16.xpose.msra.mxu0 0
        %1255 = vmatprep.subr.bf16.mxu0 0
        %1256 = vmatpush1.bf16.xpose.msra.mxu0 0
        %1257 = vmatprep.subr.bf16.mxu0 0
        %1258 = vmatpush1.bf16.xpose.msra.mxu0 0
        %1259 = vmatprep.subr.bf16.mxu0 0
        %1260 = vmatpush1.bf16.xpose.msra.mxu0 0
        %1261 = vmatprep.subr.bf16.mxu0 0
        %1262 = vmatpush1.bf16.xpose.msra.mxu0 0
        %1263 = vmatprep.subr.bf16.mxu0 0
        %1264 = vmatpush1.bf16.xpose.msra.mxu0 0
        %1265 = vmatprep.subr.bf16.mxu0 0
        %1266 = vmatpush1.bf16.xpose.msra.mxu0 0
        %1267 = vmatprep.mubr.bf16.mxu0 0
        %1268 = vmatmul.mubr.bf16.gmra.mrb[0].mxu0 %v1230
        %v1269 = vpop.f32.mrb[0].mxu0
        %v1270 = vadd.f32 0.0, %v1269
        %v1271 = vpop.f32.mrb[0].mxu0
        %v1272 = vpop.f32.mrb[0].mxu0
        %v1273 = vpop.f32.mrb[0].mxu0
        %1274 = vdwg.mxu0
        %v1275 = vmul.f32 %v921, 0.35355338
        %v1276 = vmul.f32 %v970, 0.35355338
        %v1277 = vmul.f32 %v1020, 0.35355338
        %v1278 = vmul.f32 %v1070, 0.35355338
        %v1279 = vmul.f32 %v1120, 0.35355338
        %v1280 = vmul.f32 %v1170, 0.35355338
        %v1281 = vmul.f32 %v1220, 0.35355338
        %v1282 = vmul.f32 %v1270, 0.35355338
        %v1285 = vlaneseq
        %v1286 = vshrl.u32 %v1285, 7
        %v1287 = vsub.s32 0, %v1286
        %v1288 = vrot.slane %v744, %v1287
        %v1289 = vlaneseq
        %v1290 = vshrl.u32 %v1289, 7
        %v1291 = vsub.s32 0, %v1290
        %v1292 = vrot.slane %v745, %v1291
        %v1295 = vadd.f32 %v1275, %v1288
        %v1296 = vadd.f32 %v1276, %v1292
        %v1297 = vadd.f32 %v1277, %v1288
        %v1298 = vadd.f32 %v1278, %v1292
        %v1299 = vadd.f32 %v1279, %v1288
        %v1300 = vadd.f32 %v1280, %v1292
        %v1301 = vadd.f32 %v1281, %v1288
        %v1302 = vadd.f32 %v1282, %v1292
        %v1303 = vsel %vm879, %v1295, -inf
        %1304 = vmax.xlane.f32.xlu0 %v1303
        %v1305 = vpop.xlane.xlu0 %1304
        %v1306 = vsel %vm879, %v1296, -inf
        %1307 = vmax.xlane.f32.xlu0 %v1306
        %v1308 = vpop.xlane.xlu0 %1307
        %v1309 = vsel %vm879, %v1297, -inf
        %1310 = vmax.xlane.f32.xlu0 %v1309
        %v1311 = vpop.xlane.xlu0 %1310
        %v1312 = vsel %vm879, %v1298, -inf
        %1313 = vmax.xlane.f32.xlu0 %v1312
        %v1314 = vpop.xlane.xlu0 %1313
        %v1315 = vsel %vm879, %v1299, -inf
        %1316 = vmax.xlane.f32.xlu0 %v1315
        %v1317 = vpop.xlane.xlu0 %1316
        %v1318 = vsel %vm879, %v1300, -inf
        %1319 = vmax.xlane.f32.xlu0 %v1318
        %v1320 = vpop.xlane.xlu0 %1319
        %v1321 = vsel %vm879, %v1301, -inf
        %1322 = vmax.xlane.f32.xlu0 %v1321
        %v1323 = vpop.xlane.xlu0 %1322
        %v1324 = vsel %vm879, %v1302, -inf
        %1325 = vmax.xlane.f32.xlu0 %v1324
        %v1326 = vpop.xlane.xlu0 %1325
        %v1327 = vsub.f32 %v1295, %v1305
        %v1328 = vsub.f32 %v1296, %v1308
        %v1329 = vsub.f32 %v1297, %v1311
        %v1330 = vsub.f32 %v1298, %v1314
        %v1331 = vsub.f32 %v1299, %v1317
        %v1332 = vsub.f32 %v1300, %v1320
        %v1333 = vsub.f32 %v1301, %v1323
        %v1334 = vsub.f32 %v1302, %v1326
        %v1335 = vmul.f32 %v1327, 1.442695
        %v1336 = vpow.pop %v1335
        %v1337 = vmul.f32 %v1328, 1.442695
        %v1338 = vpow.pop %v1337
        %v1339 = vmul.f32 %v1329, 1.442695
        %v1340 = vpow.pop %v1339
        %v1341 = vmul.f32 %v1330, 1.442695
        %v1342 = vpow.pop %v1341
        %v1343 = vmul.f32 %v1331, 1.442695
        %v1344 = vpow.pop %v1343
        %v1345 = vmul.f32 %v1332, 1.442695
        %v1346 = vpow.pop %v1345
        %v1347 = vmul.f32 %v1333, 1.442695
        %v1348 = vpow.pop %v1347
        %v1349 = vmul.f32 %v1334, 1.442695
        %v1350 = vpow.pop %v1349
        %v1351 = vsel %vm879, %v1336, 0.0
        %1352 = vadd.xlane.f32.xlu0 %v1351
        %v1353 = vpop.xlane.xlu0 %1352
        %v1354 = vsel %vm879, %v1338, 0.0
        %1355 = vadd.xlane.f32.xlu0 %v1354
        %v1356 = vpop.xlane.xlu0 %1355
        %v1357 = vsel %vm879, %v1340, 0.0
        %1358 = vadd.xlane.f32.xlu0 %v1357
        %v1359 = vpop.xlane.xlu0 %1358
        %v1360 = vsel %vm879, %v1342, 0.0
        %1361 = vadd.xlane.f32.xlu0 %v1360
        %v1362 = vpop.xlane.xlu0 %1361
        %v1363 = vsel %vm879, %v1344, 0.0
        %1364 = vadd.xlane.f32.xlu0 %v1363
        %v1365 = vpop.xlane.xlu0 %1364
        %v1366 = vsel %vm879, %v1346, 0.0
        %1367 = vadd.xlane.f32.xlu0 %v1366
        %v1368 = vpop.xlane.xlu0 %1367
        %v1369 = vsel %vm879, %v1348, 0.0
        %1370 = vadd.xlane.f32.xlu0 %v1369
        %v1371 = vpop.xlane.xlu0 %1370
        %v1372 = vsel %vm879, %v1350, 0.0
        %1373 = vadd.xlane.f32.xlu0 %v1372
        %v1374 = vpop.xlane.xlu0 %1373
        %v1375 = vrcp.pop %v1353
        %v1376 = vrcp.pop %v1356
        %v1377 = vrcp.pop %v1359
        %v1378 = vrcp.pop %v1362
        %v1379 = vrcp.pop %v1365
        %v1380 = vrcp.pop %v1368
        %v1381 = vrcp.pop %v1371
        %v1382 = vrcp.pop %v1374
        %v1383 = vmul.f32 %v1336, %v1375
        %v1384 = vmul.f32 %v1338, %v1376
        %v1385 = vmul.f32 %v1340, %v1377
        %v1386 = vmul.f32 %v1342, %v1378
        %v1387 = vmul.f32 %v1344, %v1379
        %v1388 = vmul.f32 %v1346, %v1380
        %v1389 = vmul.f32 %v1348, %v1381
        %v1390 = vmul.f32 %v1350, %v1382
        %v1391 = vpack.c.bf16 %v1383, %v1383
        %v1392 = vpack.c.bf16 %v1384, %v1384
        %v1393 = vpack.c.bf16 %v1385, %v1385
        %v1394 = vpack.c.bf16 %v1386, %v1386
        %v1395 = vpack.c.bf16 %v1387, %v1387
        %v1396 = vpack.c.bf16 %v1388, %v1388
        %v1397 = vpack.c.bf16 %v1389, %v1389
        %v1398 = vpack.c.bf16 %v1390, %v1390
        %v1399 = vld [vmem:[%s712] sm:$0xf]
        %v1400 = vld [vmem:[%s712 + $0x4] sm:$0xf]
        %v1401 = vld [vmem:[%s712 + $0x8] sm:$0xf]
        %v1402 = vld [vmem:[%s712 + $0xc] sm:$0xf]
        %v1403 = vld [vmem:[%s715] sm:$0x1]
        %1404 = vrot.lane.b32.xlu0 %v874, 64
        %v1405 = vpop.permute.xlu0 %1404
        %v1407 = vsel %vm879, %v1391, 0
        %vm1409 = vcmask 1043456
        %v1411 = vsel %vm1409, %v1405, 0
        %1413 = vmatprep.subr.bf16.mxu0 0
        %1414 = vmatpush1.bf16.msra.mxu0 %v1411
        %1415 = vmatprep.subr.bf16.mxu0 0
        %1416 = vmatpush1.bf16.msra.mxu0 0
        %1417 = vmatprep.subr.bf16.mxu0 0
        %1418 = vmatpush1.bf16.msra.mxu0 0
        %1419 = vmatprep.subr.bf16.mxu0 0
        %1420 = vmatpush1.bf16.msra.mxu0 0
        %1421 = vmatprep.subr.bf16.mxu0 0
        %1422 = vmatpush1.bf16.msra.mxu0 0
        %1423 = vmatprep.subr.bf16.mxu0 0
        %1424 = vmatpush1.bf16.msra.mxu0 0
        %1425 = vmatprep.subr.bf16.mxu0 0
        %1426 = vmatpush1.bf16.msra.mxu0 0
        %1427 = vmatprep.subr.bf16.mxu0 0
        %1428 = vmatpush1.bf16.msra.mxu0 0
        %1429 = vmatprep.subr.bf16.mxu0 0
        %1430 = vmatpush1.bf16.msra.mxu0 0
        %1431 = vmatprep.subr.bf16.mxu0 0
        %1432 = vmatpush1.bf16.msra.mxu0 0
        %1433 = vmatprep.subr.bf16.mxu0 0
        %1434 = vmatpush1.bf16.msra.mxu0 0
        %1435 = vmatprep.subr.bf16.mxu0 0
        %1436 = vmatpush1.bf16.msra.mxu0 0
        %1437 = vmatprep.subr.bf16.mxu0 0
        %1438 = vmatpush1.bf16.msra.mxu0 0
        %1439 = vmatprep.subr.bf16.mxu0 0
        %1440 = vmatpush1.bf16.msra.mxu0 0
        %1441 = vmatprep.subr.bf16.mxu0 0
        %1442 = vmatpush1.bf16.msra.mxu0 0
        %1443 = vmatprep.subr.bf16.mxu0 0
        %1444 = vmatpush1.bf16.msra.mxu0 0
        %1445 = vmatprep.mubr.bf16.mxu0 0
        %1446 = vmatmul.mubr.bf16.gmra.mrb[0].mxu0 %v1407
        %v1447 = vpop.f32.mrb[0].mxu0
        %v1448 = vadd.f32 0.0, %v1447
        %v1449 = vpop.f32.mrb[0].mxu0
        %v1450 = vpop.f32.mrb[0].mxu0
        %v1451 = vpop.f32.mrb[0].mxu0
        %1452 = vdwg.mxu0
        %1453 = vrot.lane.b32.xlu0 %v875, 64
        %v1454 = vpop.permute.xlu0 %1453
        %v1456 = vsel %vm879, %v1392, 0
        %v1459 = vsel %vm1409, %v1454, 0
        %1461 = vmatprep.subr.bf16.mxu0 0
        %1462 = vmatpush1.bf16.msra.mxu0 %v1459
        %1463 = vmatprep.subr.bf16.mxu0 0
        %1464 = vmatpush1.bf16.msra.mxu0 0
        %1465 = vmatprep.subr.bf16.mxu0 0
        %1466 = vmatpush1.bf16.msra.mxu0 0
        %1467 = vmatprep.subr.bf16.mxu0 0
        %1468 = vmatpush1.bf16.msra.mxu0 0
        %1469 = vmatprep.subr.bf16.mxu0 0
        %1470 = vmatpush1.bf16.msra.mxu0 0
        %1471 = vmatprep.subr.bf16.mxu0 0
        %1472 = vmatpush1.bf16.msra.mxu0 0
        %1473 = vmatprep.subr.bf16.mxu0 0
        %1474 = vmatpush1.bf16.msra.mxu0 0
        %1475 = vmatprep.subr.bf16.mxu0 0
        %1476 = vmatpush1.bf16.msra.mxu0 0
        %1477 = vmatprep.subr.bf16.mxu0 0
        %1478 = vmatpush1.bf16.msra.mxu0 0
        %1479 = vmatprep.subr.bf16.mxu0 0
        %1480 = vmatpush1.bf16.msra.mxu0 0
        %1481 = vmatprep.subr.bf16.mxu0 0
        %1482 = vmatpush1.bf16.msra.mxu0 0
        %1483 = vmatprep.subr.bf16.mxu0 0
        %1484 = vmatpush1.bf16.msra.mxu0 0
        %1485 = vmatprep.subr.bf16.mxu0 0
        %1486 = vmatpush1.bf16.msra.mxu0 0
        %1487 = vmatprep.subr.bf16.mxu0 0
        %1488 = vmatpush1.bf16.msra.mxu0 0
        %1489 = vmatprep.subr.bf16.mxu0 0
        %1490 = vmatpush1.bf16.msra.mxu0 0
        %1491 = vmatprep.subr.bf16.mxu0 0
        %1492 = vmatpush1.bf16.msra.mxu0 0
        %1493 = vmatprep.mubr.bf16.mxu0 0
        %1494 = vmatmul.mubr.bf16.gmra.mrb[0].mxu0 %v1456
        %v1495 = vpop.f32.mrb[0].mxu0
        %v1496 = vadd.f32 0.0, %v1495
        %v1497 = vpop.f32.mrb[0].mxu0
        %v1498 = vpop.f32.mrb[0].mxu0
        %v1499 = vpop.f32.mrb[0].mxu0
        %1500 = vdwg.mxu0
        %v1501 = vpack.c.bf16 %v1496, %v1448
        %v1503 = vsel %vm879, %v1501, 0
        %v1506 = vsel %vm1409, %v1399, 0
        %1508 = vmatprep.subr.bf16.mxu0 0
        %1509 = vmatpush1.bf16.msra.mxu0 %v1506
        %1510 = vmatprep.subr.bf16.mxu0 0
        %1511 = vmatpush1.bf16.msra.mxu0 0
        %1512 = vmatprep.subr.bf16.mxu0 0
        %1513 = vmatpush1.bf16.msra.mxu0 0
        %1514 = vmatprep.subr.bf16.mxu0 0
        %1515 = vmatpush1.bf16.msra.mxu0 0
        %1516 = vmatprep.subr.bf16.mxu0 0
        %1517 = vmatpush1.bf16.msra.mxu0 0
        %1518 = vmatprep.subr.bf16.mxu0 0
        %1519 = vmatpush1.bf16.msra.mxu0 0
        %1520 = vmatprep.subr.bf16.mxu0 0
        %1521 = vmatpush1.bf16.msra.mxu0 0
        %1522 = vmatprep.subr.bf16.mxu0 0
        %1523 = vmatpush1.bf16.msra.mxu0 0
        %1524 = vmatprep.subr.bf16.mxu0 0
        %1525 = vmatpush1.bf16.msra.mxu0 0
        %1526 = vmatprep.subr.bf16.mxu0 0
        %1527 = vmatpush1.bf16.msra.mxu0 0
        %1528 = vmatprep.subr.bf16.mxu0 0
        %1529 = vmatpush1.bf16.msra.mxu0 0
        %1530 = vmatprep.subr.bf16.mxu0 0
        %1531 = vmatpush1.bf16.msra.mxu0 0
        %1532 = vmatprep.subr.bf16.mxu0 0
        %1533 = vmatpush1.bf16.msra.mxu0 0
        %1534 = vmatprep.subr.bf16.mxu0 0
        %1535 = vmatpush1.bf16.msra.mxu0 0
        %1536 = vmatprep.subr.bf16.mxu0 0
        %1537 = vmatpush1.bf16.msra.mxu0 0
        %1538 = vmatprep.subr.bf16.mxu0 0
        %1539 = vmatpush1.bf16.msra.mxu0 0
        %1540 = vmatprep.mubr.bf16.mxu0 0
        %1541 = vmatmul.mubr.bf16.gmra.mrb[0].mxu0 %v1503
        %v1542 = vpop.f32.mrb[0].mxu0
        %v1543 = vadd.f32 0.0, %v1542
        %v1544 = vpop.f32.mrb[0].mxu0
        %v1545 = vpop.f32.mrb[0].mxu0
        %v1546 = vadd.f32 0.0, %v1545
        %v1547 = vpop.f32.mrb[0].mxu0
        %1548 = vdwg.mxu0
        %v1550 = vlaneseq
        %v1551 = vshrl.u32 %v1550, 7
        %v1552 = vsub.s32 0, %v1551
        %v1553 = vrot.slane %v1403, %v1552
        %v1555 = vadd.f32 %v1553, %v1543
        %v1556 = vadd.f32 %v1553, %v1546
        %1557 = vrot.lane.b32.xlu0 %v874, 56
        %v1558 = vpop.permute.xlu0 %1557
        %v1560 = vsel %vm879, %v1393, 0
        %v1563 = vsel %vm1409, %v1558, 0
        %1565 = vmatprep.subr.bf16.mxu0 0
        %1566 = vmatpush1.bf16.msra.mxu0 %v1563
        %1567 = vmatprep.subr.bf16.mxu0 0
        %1568 = vmatpush1.bf16.msra.mxu0 0
        %1569 = vmatprep.subr.bf16.mxu0 0
        %1570 = vmatpush1.bf16.msra.mxu0 0
        %1571 = vmatprep.subr.bf16.mxu0 0
        %1572 = vmatpush1.bf16.msra.mxu0 0
        %1573 = vmatprep.subr.bf16.mxu0 0
        %1574 = vmatpush1.bf16.msra.mxu0 0
        %1575 = vmatprep.subr.bf16.mxu0 0
        %1576 = vmatpush1.bf16.msra.mxu0 0
        %1577 = vmatprep.subr.bf16.mxu0 0
        %1578 = vmatpush1.bf16.msra.mxu0 0
        %1579 = vmatprep.subr.bf16.mxu0 0
        %1580 = vmatpush1.bf16.msra.mxu0 0
        %1581 = vmatprep.subr.bf16.mxu0 0
        %1582 = vmatpush1.bf16.msra.mxu0 0
        %1583 = vmatprep.subr.bf16.mxu0 0
        %1584 = vmatpush1.bf16.msra.mxu0 0
        %1585 = vmatprep.subr.bf16.mxu0 0
        %1586 = vmatpush1.bf16.msra.mxu0 0
        %1587 = vmatprep.subr.bf16.mxu0 0
        %1588 = vmatpush1.bf16.msra.mxu0 0
        %1589 = vmatprep.subr.bf16.mxu0 0
        %1590 = vmatpush1.bf16.msra.mxu0 0
        %1591 = vmatprep.subr.bf16.mxu0 0
        %1592 = vmatpush1.bf16.msra.mxu0 0
        %1593 = vmatprep.subr.bf16.mxu0 0
        %1594 = vmatpush1.bf16.msra.mxu0 0
        %1595 = vmatprep.subr.bf16.mxu0 0
        %1596 = vmatpush1.bf16.msra.mxu0 0
        %1597 = vmatprep.mubr.bf16.mxu0 0
        %1598 = vmatmul.mubr.bf16.gmra.mrb[0].mxu0 %v1560
        %v1599 = vpop.f32.mrb[0].mxu0
        %v1600 = vadd.f32 0.0, %v1599
        %v1601 = vpop.f32.mrb[0].mxu0
        %v1602 = vpop.f32.mrb[0].mxu0
        %v1603 = vpop.f32.mrb[0].mxu0
        %1604 = vdwg.mxu0
        %1605 = vrot.lane.b32.xlu0 %v875, 56
        %v1606 = vpop.permute.xlu0 %1605
        %v1608 = vsel %vm879, %v1394, 0
        %v1611 = vsel %vm1409, %v1606, 0
        %1613 = vmatprep.subr.bf16.mxu0 0
        %1614 = vmatpush1.bf16.msra.mxu0 %v1611
        %1615 = vmatprep.subr.bf16.mxu0 0
        %1616 = vmatpush1.bf16.msra.mxu0 0
        %1617 = vmatprep.subr.bf16.mxu0 0
        %1618 = vmatpush1.bf16.msra.mxu0 0
        %1619 = vmatprep.subr.bf16.mxu0 0
        %1620 = vmatpush1.bf16.msra.mxu0 0
        %1621 = vmatprep.subr.bf16.mxu0 0
        %1622 = vmatpush1.bf16.msra.mxu0 0
        %1623 = vmatprep.subr.bf16.mxu0 0
        %1624 = vmatpush1.bf16.msra.mxu0 0
        %1625 = vmatprep.subr.bf16.mxu0 0
        %1626 = vmatpush1.bf16.msra.mxu0 0
        %1627 = vmatprep.subr.bf16.mxu0 0
        %1628 = vmatpush1.bf16.msra.mxu0 0
        %1629 = vmatprep.subr.bf16.mxu0 0
        %1630 = vmatpush1.bf16.msra.mxu0 0
        %1631 = vmatprep.subr.bf16.mxu0 0
        %1632 = vmatpush1.bf16.msra.mxu0 0
        %1633 = vmatprep.subr.bf16.mxu0 0
        %1634 = vmatpush1.bf16.msra.mxu0 0
        %1635 = vmatprep.subr.bf16.mxu0 0
        %1636 = vmatpush1.bf16.msra.mxu0 0
        %1637 = vmatprep.subr.bf16.mxu0 0
        %1638 = vmatpush1.bf16.msra.mxu0 0
        %1639 = vmatprep.subr.bf16.mxu0 0
        %1640 = vmatpush1.bf16.msra.mxu0 0
        %1641 = vmatprep.subr.bf16.mxu0 0
        %1642 = vmatpush1.bf16.msra.mxu0 0
        %1643 = vmatprep.subr.bf16.mxu0 0
        %1644 = vmatpush1.bf16.msra.mxu0 0
        %1645 = vmatprep.mubr.bf16.mxu0 0
        %1646 = vmatmul.mubr.bf16.gmra.mrb[0].mxu0 %v1608
        %v1647 = vpop.f32.mrb[0].mxu0
        %v1648 = vadd.f32 0.0, %v1647
        %v1649 = vpop.f32.mrb[0].mxu0
        %v1650 = vpop.f32.mrb[0].mxu0
        %v1651 = vpop.f32.mrb[0].mxu0
        %1652 = vdwg.mxu0
        %v1653 = vpack.c.bf16 %v1648, %v1600
        %v1655 = vsel %vm879, %v1653, 0
        %v1658 = vsel %vm1409, %v1400, 0
        %1660 = vmatprep.subr.bf16.mxu0 0
        %1661 = vmatpush1.bf16.msra.mxu0 %v1658
        %1662 = vmatprep.subr.bf16.mxu0 0
        %1663 = vmatpush1.bf16.msra.mxu0 0
        %1664 = vmatprep.subr.bf16.mxu0 0
        %1665 = vmatpush1.bf16.msra.mxu0 0
        %1666 = vmatprep.subr.bf16.mxu0 0
        %1667 = vmatpush1.bf16.msra.mxu0 0
        %1668 = vmatprep.subr.bf16.mxu0 0
        %1669 = vmatpush1.bf16.msra.mxu0 0
        %1670 = vmatprep.subr.bf16.mxu0 0
        %1671 = vmatpush1.bf16.msra.mxu0 0
        %1672 = vmatprep.subr.bf16.mxu0 0
        %1673 = vmatpush1.bf16.msra.mxu0 0
        %1674 = vmatprep.subr.bf16.mxu0 0
        %1675 = vmatpush1.bf16.msra.mxu0 0
        %1676 = vmatprep.subr.bf16.mxu0 0
        %1677 = vmatpush1.bf16.msra.mxu0 0
        %1678 = vmatprep.subr.bf16.mxu0 0
        %1679 = vmatpush1.bf16.msra.mxu0 0
        %1680 = vmatprep.subr.bf16.mxu0 0
        %1681 = vmatpush1.bf16.msra.mxu0 0
        %1682 = vmatprep.subr.bf16.mxu0 0
        %1683 = vmatpush1.bf16.msra.mxu0 0
        %1684 = vmatprep.subr.bf16.mxu0 0
        %1685 = vmatpush1.bf16.msra.mxu0 0
        %1686 = vmatprep.subr.bf16.mxu0 0
        %1687 = vmatpush1.bf16.msra.mxu0 0
        %1688 = vmatprep.subr.bf16.mxu0 0
        %1689 = vmatpush1.bf16.msra.mxu0 0
        %1690 = vmatprep.subr.bf16.mxu0 0
        %1691 = vmatpush1.bf16.msra.mxu0 0
        %1692 = vmatprep.mubr.bf16.mxu0 0
        %1693 = vmatmul.mubr.bf16.gmra.mrb[0].mxu0 %v1655
        %v1694 = vpop.f32.mrb[0].mxu0
        %v1695 = vadd.f32 0.0, %v1694
        %v1696 = vpop.f32.mrb[0].mxu0
        %v1697 = vpop.f32.mrb[0].mxu0
        %v1698 = vadd.f32 0.0, %v1697
        %v1699 = vpop.f32.mrb[0].mxu0
        %1700 = vdwg.mxu0
        %v1701 = vadd.f32 %v1555, %v1695
        %v1702 = vadd.f32 %v1556, %v1698
        %1703 = vrot.lane.b32.xlu0 %v874, 48
        %v1704 = vpop.permute.xlu0 %1703
        %v1706 = vsel %vm879, %v1395, 0
        %v1709 = vsel %vm1409, %v1704, 0
        %1711 = vmatprep.subr.bf16.mxu0 0
        %1712 = vmatpush1.bf16.msra.mxu0 %v1709
        %1713 = vmatprep.subr.bf16.mxu0 0
        %1714 = vmatpush1.bf16.msra.mxu0 0
        %1715 = vmatprep.subr.bf16.mxu0 0
        %1716 = vmatpush1.bf16.msra.mxu0 0
        %1717 = vmatprep.subr.bf16.mxu0 0
        %1718 = vmatpush1.bf16.msra.mxu0 0
        %1719 = vmatprep.subr.bf16.mxu0 0
        %1720 = vmatpush1.bf16.msra.mxu0 0
        %1721 = vmatprep.subr.bf16.mxu0 0
        %1722 = vmatpush1.bf16.msra.mxu0 0
        %1723 = vmatprep.subr.bf16.mxu0 0
        %1724 = vmatpush1.bf16.msra.mxu0 0
        %1725 = vmatprep.subr.bf16.mxu0 0
        %1726 = vmatpush1.bf16.msra.mxu0 0
        %1727 = vmatprep.subr.bf16.mxu0 0
        %1728 = vmatpush1.bf16.msra.mxu0 0
        %1729 = vmatprep.subr.bf16.mxu0 0
        %1730 = vmatpush1.bf16.msra.mxu0 0
        %1731 = vmatprep.subr.bf16.mxu0 0
        %1732 = vmatpush1.bf16.msra.mxu0 0
        %1733 = vmatprep.subr.bf16.mxu0 0
        %1734 = vmatpush1.bf16.msra.mxu0 0
        %1735 = vmatprep.subr.bf16.mxu0 0
        %1736 = vmatpush1.bf16.msra.mxu0 0
        %1737 = vmatprep.subr.bf16.mxu0 0
        %1738 = vmatpush1.bf16.msra.mxu0 0
        %1739 = vmatprep.subr.bf16.mxu0 0
        %1740 = vmatpush1.bf16.msra.mxu0 0
        %1741 = vmatprep.subr.bf16.mxu0 0
        %1742 = vmatpush1.bf16.msra.mxu0 0
        %1743 = vmatprep.mubr.bf16.mxu0 0
        %1744 = vmatmul.mubr.bf16.gmra.mrb[0].mxu0 %v1706
        %v1745 = vpop.f32.mrb[0].mxu0
        %v1746 = vadd.f32 0.0, %v1745
        %v1747 = vpop.f32.mrb[0].mxu0
        %v1748 = vpop.f32.mrb[0].mxu0
        %v1749 = vpop.f32.mrb[0].mxu0
        %1750 = vdwg.mxu0
        %1751 = vrot.lane.b32.xlu0 %v875, 48
        %v1752 = vpop.permute.xlu0 %1751
        %v1754 = vsel %vm879, %v1396, 0
        %v1757 = vsel %vm1409, %v1752, 0
        %1759 = vmatprep.subr.bf16.mxu0 0
        %1760 = vmatpush1.bf16.msra.mxu0 %v1757
        %1761 = vmatprep.subr.bf16.mxu0 0
        %1762 = vmatpush1.bf16.msra.mxu0 0
        %1763 = vmatprep.subr.bf16.mxu0 0
        %1764 = vmatpush1.bf16.msra.mxu0 0
        %1765 = vmatprep.subr.bf16.mxu0 0
        %1766 = vmatpush1.bf16.msra.mxu0 0
        %1767 = vmatprep.subr.bf16.mxu0 0
        %1768 = vmatpush1.bf16.msra.mxu0 0
        %1769 = vmatprep.subr.bf16.mxu0 0
        %1770 = vmatpush1.bf16.msra.mxu0 0
        %1771 = vmatprep.subr.bf16.mxu0 0
        %1772 = vmatpush1.bf16.msra.mxu0 0
        %1773 = vmatprep.subr.bf16.mxu0 0
        %1774 = vmatpush1.bf16.msra.mxu0 0
        %1775 = vmatprep.subr.bf16.mxu0 0
        %1776 = vmatpush1.bf16.msra.mxu0 0
        %1777 = vmatprep.subr.bf16.mxu0 0
        %1778 = vmatpush1.bf16.msra.mxu0 0
        %1779 = vmatprep.subr.bf16.mxu0 0
        %1780 = vmatpush1.bf16.msra.mxu0 0
        %1781 = vmatprep.subr.bf16.mxu0 0
        %1782 = vmatpush1.bf16.msra.mxu0 0
        %1783 = vmatprep.subr.bf16.mxu0 0
        %1784 = vmatpush1.bf16.msra.mxu0 0
        %1785 = vmatprep.subr.bf16.mxu0 0
        %1786 = vmatpush1.bf16.msra.mxu0 0
        %1787 = vmatprep.subr.bf16.mxu0 0
        %1788 = vmatpush1.bf16.msra.mxu0 0
        %1789 = vmatprep.subr.bf16.mxu0 0
        %1790 = vmatpush1.bf16.msra.mxu0 0
        %1791 = vmatprep.mubr.bf16.mxu0 0
        %1792 = vmatmul.mubr.bf16.gmra.mrb[0].mxu0 %v1754
        %v1793 = vpop.f32.mrb[0].mxu0
        %v1794 = vadd.f32 0.0, %v1793
        %v1795 = vpop.f32.mrb[0].mxu0
        %v1796 = vpop.f32.mrb[0].mxu0
        %v1797 = vpop.f32.mrb[0].mxu0
        %1798 = vdwg.mxu0
        %v1799 = vpack.c.bf16 %v1794, %v1746
        %v1801 = vsel %vm879, %v1799, 0
        %v1804 = vsel %vm1409, %v1401, 0
        %1806 = vmatprep.subr.bf16.mxu0 0
        %1807 = vmatpush1.bf16.msra.mxu0 %v1804
        %1808 = vmatprep.subr.bf16.mxu0 0
        %1809 = vmatpush1.bf16.msra.mxu0 0
        %1810 = vmatprep.subr.bf16.mxu0 0
        %1811 = vmatpush1.bf16.msra.mxu0 0
        %1812 = vmatprep.subr.bf16.mxu0 0
        %1813 = vmatpush1.bf16.msra.mxu0 0
        %1814 = vmatprep.subr.bf16.mxu0 0
        %1815 = vmatpush1.bf16.msra.mxu0 0
        %1816 = vmatprep.subr.bf16.mxu0 0
        %1817 = vmatpush1.bf16.msra.mxu0 0
        %1818 = vmatprep.subr.bf16.mxu0 0
        %1819 = vmatpush1.bf16.msra.mxu0 0
        %1820 = vmatprep.subr.bf16.mxu0 0
        %1821 = vmatpush1.bf16.msra.mxu0 0
        %1822 = vmatprep.subr.bf16.mxu0 0
        %1823 = vmatpush1.bf16.msra.mxu0 0
        %1824 = vmatprep.subr.bf16.mxu0 0
        %1825 = vmatpush1.bf16.msra.mxu0 0
        %1826 = vmatprep.subr.bf16.mxu0 0
        %1827 = vmatpush1.bf16.msra.mxu0 0
        %1828 = vmatprep.subr.bf16.mxu0 0
        %1829 = vmatpush1.bf16.msra.mxu0 0
        %1830 = vmatprep.subr.bf16.mxu0 0
        %1831 = vmatpush1.bf16.msra.mxu0 0
        %1832 = vmatprep.subr.bf16.mxu0 0
        %1833 = vmatpush1.bf16.msra.mxu0 0
        %1834 = vmatprep.subr.bf16.mxu0 0
        %1835 = vmatpush1.bf16.msra.mxu0 0
        %1836 = vmatprep.subr.bf16.mxu0 0
        %1837 = vmatpush1.bf16.msra.mxu0 0
        %1838 = vmatprep.mubr.bf16.mxu0 0
        %1839 = vmatmul.mubr.bf16.gmra.mrb[0].mxu0 %v1801
        %v1840 = vpop.f32.mrb[0].mxu0
        %v1841 = vadd.f32 0.0, %v1840
        %v1842 = vpop.f32.mrb[0].mxu0
        %v1843 = vpop.f32.mrb[0].mxu0
        %v1844 = vadd.f32 0.0, %v1843
        %v1845 = vpop.f32.mrb[0].mxu0
        %1846 = vdwg.mxu0
        %v1847 = vadd.f32 %v1701, %v1841
        %v1848 = vadd.f32 %v1702, %v1844
        %1849 = vrot.lane.b32.xlu0 %v874, 40
        %v1850 = vpop.permute.xlu0 %1849
        %v1852 = vsel %vm879, %v1397, 0
        %v1855 = vsel %vm1409, %v1850, 0
        %1857 = vmatprep.subr.bf16.mxu0 0
        %1858 = vmatpush1.bf16.msra.mxu0 %v1855
        %1859 = vmatprep.subr.bf16.mxu0 0
        %1860 = vmatpush1.bf16.msra.mxu0 0
        %1861 = vmatprep.subr.bf16.mxu0 0
        %1862 = vmatpush1.bf16.msra.mxu0 0
        %1863 = vmatprep.subr.bf16.mxu0 0
        %1864 = vmatpush1.bf16.msra.mxu0 0
        %1865 = vmatprep.subr.bf16.mxu0 0
        %1866 = vmatpush1.bf16.msra.mxu0 0
        %1867 = vmatprep.subr.bf16.mxu0 0
        %1868 = vmatpush1.bf16.msra.mxu0 0
        %1869 = vmatprep.subr.bf16.mxu0 0
        %1870 = vmatpush1.bf16.msra.mxu0 0
        %1871 = vmatprep.subr.bf16.mxu0 0
        %1872 = vmatpush1.bf16.msra.mxu0 0
        %1873 = vmatprep.subr.bf16.mxu0 0
        %1874 = vmatpush1.bf16.msra.mxu0 0
        %1875 = vmatprep.subr.bf16.mxu0 0
        %1876 = vmatpush1.bf16.msra.mxu0 0
        %1877 = vmatprep.subr.bf16.mxu0 0
        %1878 = vmatpush1.bf16.msra.mxu0 0
        %1879 = vmatprep.subr.bf16.mxu0 0
        %1880 = vmatpush1.bf16.msra.mxu0 0
        %1881 = vmatprep.subr.bf16.mxu0 0
        %1882 = vmatpush1.bf16.msra.mxu0 0
        %1883 = vmatprep.subr.bf16.mxu0 0
        %1884 = vmatpush1.bf16.msra.mxu0 0
        %1885 = vmatprep.subr.bf16.mxu0 0
        %1886 = vmatpush1.bf16.msra.mxu0 0
        %1887 = vmatprep.subr.bf16.mxu0 0
        %1888 = vmatpush1.bf16.msra.mxu0 0
        %1889 = vmatprep.mubr.bf16.mxu0 0
        %1890 = vmatmul.mubr.bf16.gmra.mrb[0].mxu0 %v1852
        %v1891 = vpop.f32.mrb[0].mxu0
        %v1892 = vadd.f32 0.0, %v1891
        %v1893 = vpop.f32.mrb[0].mxu0
        %v1894 = vpop.f32.mrb[0].mxu0
        %v1895 = vpop.f32.mrb[0].mxu0
        %1896 = vdwg.mxu0
        %1897 = vrot.lane.b32.xlu0 %v875, 40
        %v1898 = vpop.permute.xlu0 %1897
        %v1900 = vsel %vm879, %v1398, 0
        %v1903 = vsel %vm1409, %v1898, 0
        %1905 = vmatprep.subr.bf16.mxu0 0
        %1906 = vmatpush1.bf16.msra.mxu0 %v1903
        %1907 = vmatprep.subr.bf16.mxu0 0
        %1908 = vmatpush1.bf16.msra.mxu0 0
        %1909 = vmatprep.subr.bf16.mxu0 0
        %1910 = vmatpush1.bf16.msra.mxu0 0
        %1911 = vmatprep.subr.bf16.mxu0 0
        %1912 = vmatpush1.bf16.msra.mxu0 0
        %1913 = vmatprep.subr.bf16.mxu0 0
        %1914 = vmatpush1.bf16.msra.mxu0 0
        %1915 = vmatprep.subr.bf16.mxu0 0
        %1916 = vmatpush1.bf16.msra.mxu0 0
        %1917 = vmatprep.subr.bf16.mxu0 0
        %1918 = vmatpush1.bf16.msra.mxu0 0
        %1919 = vmatprep.subr.bf16.mxu0 0
        %1920 = vmatpush1.bf16.msra.mxu0 0
        %1921 = vmatprep.subr.bf16.mxu0 0
        %1922 = vmatpush1.bf16.msra.mxu0 0
        %1923 = vmatprep.subr.bf16.mxu0 0
        %1924 = vmatpush1.bf16.msra.mxu0 0
        %1925 = vmatprep.subr.bf16.mxu0 0
        %1926 = vmatpush1.bf16.msra.mxu0 0
        %1927 = vmatprep.subr.bf16.mxu0 0
        %1928 = vmatpush1.bf16.msra.mxu0 0
        %1929 = vmatprep.subr.bf16.mxu0 0
        %1930 = vmatpush1.bf16.msra.mxu0 0
        %1931 = vmatprep.subr.bf16.mxu0 0
        %1932 = vmatpush1.bf16.msra.mxu0 0
        %1933 = vmatprep.subr.bf16.mxu0 0
        %1934 = vmatpush1.bf16.msra.mxu0 0
        %1935 = vmatprep.subr.bf16.mxu0 0
        %1936 = vmatpush1.bf16.msra.mxu0 0
        %1937 = vmatprep.mubr.bf16.mxu0 0
        %1938 = vmatmul.mubr.bf16.gmra.mrb[0].mxu0 %v1900
        %v1939 = vpop.f32.mrb[0].mxu0
        %v1940 = vadd.f32 0.0, %v1939
        %v1941 = vpop.f32.mrb[0].mxu0
        %v1942 = vpop.f32.mrb[0].mxu0
        %v1943 = vpop.f32.mrb[0].mxu0
        %1944 = vdwg.mxu0
        %v1945 = vpack.c.bf16 %v1940, %v1892
        %v1947 = vsel %vm879, %v1945, 0
        %v1950 = vsel %vm1409, %v1402, 0
        %1952 = vmatprep.subr.bf16.mxu0 0
        %1953 = vmatpush1.bf16.msra.mxu0 %v1950
        %1954 = vmatprep.subr.bf16.mxu0 0
        %1955 = vmatpush1.bf16.msra.mxu0 0
        %1956 = vmatprep.subr.bf16.mxu0 0
        %1957 = vmatpush1.bf16.msra.mxu0 0
        %1958 = vmatprep.subr.bf16.mxu0 0
        %1959 = vmatpush1.bf16.msra.mxu0 0
        %1960 = vmatprep.subr.bf16.mxu0 0
        %1961 = vmatpush1.bf16.msra.mxu0 0
        %1962 = vmatprep.subr.bf16.mxu0 0
        %1963 = vmatpush1.bf16.msra.mxu0 0
        %1964 = vmatprep.subr.bf16.mxu0 0
        %1965 = vmatpush1.bf16.msra.mxu0 0
        %1966 = vmatprep.subr.bf16.mxu0 0
        %1967 = vmatpush1.bf16.msra.mxu0 0
        %1968 = vmatprep.subr.bf16.mxu0 0
        %1969 = vmatpush1.bf16.msra.mxu0 0
        %1970 = vmatprep.subr.bf16.mxu0 0
        %1971 = vmatpush1.bf16.msra.mxu0 0
        %1972 = vmatprep.subr.bf16.mxu0 0
        %1973 = vmatpush1.bf16.msra.mxu0 0
        %1974 = vmatprep.subr.bf16.mxu0 0
        %1975 = vmatpush1.bf16.msra.mxu0 0
        %1976 = vmatprep.subr.bf16.mxu0 0
        %1977 = vmatpush1.bf16.msra.mxu0 0
        %1978 = vmatprep.subr.bf16.mxu0 0
        %1979 = vmatpush1.bf16.msra.mxu0 0
        %1980 = vmatprep.subr.bf16.mxu0 0
        %1981 = vmatpush1.bf16.msra.mxu0 0
        %1982 = vmatprep.subr.bf16.mxu0 0
        %1983 = vmatpush1.bf16.msra.mxu0 0
        %1984 = vmatprep.mubr.bf16.mxu0 0
        %1985 = vmatmul.mubr.bf16.gmra.mrb[0].mxu0 %v1947
        %v1986 = vpop.f32.mrb[0].mxu0
        %v1987 = vadd.f32 0.0, %v1986
        %v1988 = vpop.f32.mrb[0].mxu0
        %v1989 = vpop.f32.mrb[0].mxu0
        %v1990 = vadd.f32 0.0, %v1989
        %v1991 = vpop.f32.mrb[0].mxu0
        %1992 = vdwg.mxu0
        %v1993 = vadd.f32 %v1847, %v1987
        %v1994 = vadd.f32 %v1848, %v1990
        %v1995 = vadd.f32 %v742, %v1993
        %v1996 = vadd.f32 %v743, %v1994
        %v1997 = vld [vmem:[%s718] sm:$0x1]
        %v1998 = vld [vmem:[%s601] sm:$0x1]
        %v1999 = vsel %vm748, %v1995, 0.0
        %2000 = vadd.xlane.f32.xlu0 %v1999
        %v2001 = vpop.xlane.xlu0 %2000
        %v2002 = vsel %vm748, %v1996, 0.0
        %2003 = vadd.xlane.f32.xlu0 %v2002
        %v2004 = vpop.xlane.xlu0 %2003
        %v2005 = vmul.f32 %v2001, %v755
        %v2006 = vmul.f32 %v2004, %v755
        %v2007 = vsub.f32 %v1995, %v2005
        %v2008 = vsub.f32 %v1996, %v2006
        %v2009 = vmul.f32 %v2007, %v2007
        %v2010 = vmul.f32 %v2008, %v2008
        %v2011 = vsel %vm748, %v2009, 0.0
        %2012 = vadd.xlane.f32.xlu0 %v2011
        %v2013 = vpop.xlane.xlu0 %2012
        %v2014 = vsel %vm748, %v2010, 0.0
        %2015 = vadd.xlane.f32.xlu0 %v2014
        %v2016 = vpop.xlane.xlu0 %2015
        %v2017 = vmul.f32 %v2013, 0.032258064
        %v2018 = vmul.f32 %v2016, 0.032258064
        %v2020 = vlaneseq
        %v2021 = vshrl.u32 %v2020, 7
        %v2022 = vsub.s32 0, %v2021
        %v2023 = vrot.slane %v1997, %v2022
        %v2025 = vmul.f32 %v2023, %v2007
        %v2026 = vmul.f32 %v2023, %v2008
        %v2027 = vrsqrt.pop %v2017
        %v2028 = vmul.f32 %v2017, %v2027
        %vm2029 = vcmp.eq.f32.partialorder %v2017, inf
        %v2030 = vsel %vm2029, %v2017, %v2028
        %vm2031 = vcmp.eq.f32.partialorder %v2017, 0.0
        %v2032 = vand.u32 %v2017, 2147483648
        %v2033 = vsel %vm2031, %v2032, %v2030
        %v2034 = vrsqrt.pop %v2018
        %v2035 = vmul.f32 %v2018, %v2034
        %vm2036 = vcmp.eq.f32.partialorder %v2018, inf
        %v2037 = vsel %vm2036, %v2018, %v2035
        %vm2038 = vcmp.eq.f32.partialorder %v2018, 0.0
        %v2039 = vand.u32 %v2018, 2147483648
        %v2040 = vsel %vm2038, %v2039, %v2037
        %v2041 = vadd.f32 %v2033, 1e-06
        %v2042 = vadd.f32 %v2040, 1e-06
        %v2043 = vrcp.pop %v2041
        %v2044 = vmul.f32 %v2025, %v2043
        %v2045 = vrcp.pop %v2042
        %v2046 = vmul.f32 %v2026, %v2045
        %v2048 = vlaneseq
        %v2049 = vshrl.u32 %v2048, 7
        %v2050 = vsub.s32 0, %v2049
        %v2051 = vrot.slane %v1998, %v2050
        %v2053 = vadd.f32 %v2044, %v2051
        %v2054 = vadd.f32 %v2046, %v2051
        %v2055 = vpack.c.bf16 %v2054, %v2053
        %v2056 = vld [vmem:[%s723] sm:$0xf]
        %v2057 = vld [vmem:[%s723 + $0x4] sm:$0xf]
        %v2058 = vld [vmem:[%s723 + $0x8] sm:$0xf]
        %v2059 = vld [vmem:[%s723 + $0xc] sm:$0xf]
        %v2060 = vld [vmem:[%s609] sm:$0x1]
        %v2062 = vlaneseq
        %v2063 = vshrl.u32 %v2062, 7
        %v2064 = vsub.s32 0, %v2063
        %v2065 = vrot.slane %v2060, %v2064
        %v2071 = vunpack.c.l.b16 %v2056
        %v2072 = vunpack.c.l.b16 %v2057
        %v2073 = vunpack.c.l.b16 %v2058
        %v2074 = vunpack.c.l.b16 %v2059
        %v2075 = vpack.c.b16 %v2072, %v2071
        %v2076 = vpack.c.b16 %v2074, %v2073
        %v2080 = vsel %vm748, %v2055, 0
        %2082 = vmatprep.subr.bf16.mxu0 0
        %2083 = vmatpush1.bf16.msra.mxu0 %v2075
        %2084 = vmatprep.subr.bf16.mxu0 0
        %2085 = vmatpush1.bf16.msra.mxu0 %v2076
        %2086 = vmatprep.subr.bf16.mxu0 0
        %2087 = vmatpush1.bf16.msra.mxu0 0
        %2088 = vmatprep.subr.bf16.mxu0 0
        %2089 = vmatpush1.bf16.msra.mxu0 0
        %2090 = vmatprep.subr.bf16.mxu0 0
        %2091 = vmatpush1.bf16.msra.mxu0 0
        %2092 = vmatprep.subr.bf16.mxu0 0
        %2093 = vmatpush1.bf16.msra.mxu0 0
        %2094 = vmatprep.subr.bf16.mxu0 0
        %2095 = vmatpush1.bf16.msra.mxu0 0
        %2096 = vmatprep.subr.bf16.mxu0 0
        %2097 = vmatpush1.bf16.msra.mxu0 0
        %2098 = vmatprep.subr.bf16.mxu0 0
        %2099 = vmatpush1.bf16.msra.mxu0 0
        %2100 = vmatprep.subr.bf16.mxu0 0
        %2101 = vmatpush1.bf16.msra.mxu0 0
        %2102 = vmatprep.subr.bf16.mxu0 0
        %2103 = vmatpush1.bf16.msra.mxu0 0
        %2104 = vmatprep.subr.bf16.mxu0 0
        %2105 = vmatpush1.bf16.msra.mxu0 0
        %2106 = vmatprep.subr.bf16.mxu0 0
        %2107 = vmatpush1.bf16.msra.mxu0 0
        %2108 = vmatprep.subr.bf16.mxu0 0
        %2109 = vmatpush1.bf16.msra.mxu0 0
        %2110 = vmatprep.subr.bf16.mxu0 0
        %2111 = vmatpush1.bf16.msra.mxu0 0
        %2112 = vmatprep.subr.bf16.mxu0 0
        %2113 = vmatpush1.bf16.msra.mxu0 0
        %2114 = vmatprep.mubr.bf16.mxu0 0
        %2115 = vmatmul.mubr.bf16.gmra.mrb[0].mxu0 %v2080
        %v2116 = vpop.f32.mrb[0].mxu0
        %v2117 = vadd.f32 %v2065, %v2116
        %v2118 = vpop.f32.mrb[0].mxu0
        %v2119 = vpop.f32.mrb[0].mxu0
        %v2120 = vadd.f32 %v2065, %v2119
        %v2121 = vpop.f32.mrb[0].mxu0
        %2122 = vdwg.mxu0
        %v2123 = vmax.f32 %v2117, 0.0
        %v2124 = vmax.f32 %v2120, 0.0
        %v2125 = vpack.c.bf16 %v2124, %v2123
        %v2126 = vld [vmem:[%s728] sm:$0xf]
        %v2127 = vld [vmem:[%s728 + $0x4] sm:$0xf]
        %v2128 = vld [vmem:[%s728 + $0x8] sm:$0xf]
        %v2129 = vld [vmem:[%s728 + $0xc] sm:$0xf]
        %v2130 = vld [vmem:[%s728 + $0x10] sm:$0xf]
        %v2131 = vld [vmem:[%s728 + $0x14] sm:$0xf]
        %v2132 = vld [vmem:[%s728 + $0x18] sm:$0xf]
        %v2133 = vld [vmem:[%s728 + $0x1c] sm:$0xf]
        %v2134 = vld [vmem:[%s731] sm:$0x1]
        %v2136 = vlaneseq
        %v2137 = vshrl.u32 %v2136, 7
        %v2138 = vsub.s32 0, %v2137
        %v2139 = vrot.slane %v2134, %v2138
        %v2149 = vunpack.c.l.b16 %v2126
        %v2150 = vunpack.c.l.b16 %v2127
        %v2151 = vunpack.c.l.b16 %v2128
        %v2152 = vunpack.c.l.b16 %v2129
        %v2153 = vunpack.c.l.b16 %v2130
        %v2154 = vunpack.c.l.b16 %v2131
        %v2155 = vunpack.c.l.b16 %v2132
        %v2156 = vunpack.c.l.b16 %v2133
        %v2157 = vpack.c.b16 %v2150, %v2149
        %v2158 = vpack.c.b16 %v2152, %v2151
        %v2159 = vpack.c.b16 %v2154, %v2153
        %v2160 = vpack.c.b16 %v2156, %v2155
        %vm2165 = vcmask 523264
        %v2167 = vsel %vm2165, %v2125, 0
        %2169 = vmatprep.subr.bf16.mxu0 0
        %2170 = vmatpush1.bf16.msra.mxu0 %v2157
        %2171 = vmatprep.subr.bf16.mxu0 0
        %2172 = vmatpush1.bf16.msra.mxu0 %v2158
        %2173 = vmatprep.subr.bf16.mxu0 0
        %2174 = vmatpush1.bf16.msra.mxu0 %v2159
        %2175 = vmatprep.subr.bf16.mxu0 0
        %2176 = vmatpush1.bf16.msra.mxu0 %v2160
        %2177 = vmatprep.subr.bf16.mxu0 0
        %2178 = vmatpush1.bf16.msra.mxu0 0
        %2179 = vmatprep.subr.bf16.mxu0 0
        %2180 = vmatpush1.bf16.msra.mxu0 0
        %2181 = vmatprep.subr.bf16.mxu0 0
        %2182 = vmatpush1.bf16.msra.mxu0 0
        %2183 = vmatprep.subr.bf16.mxu0 0
        %2184 = vmatpush1.bf16.msra.mxu0 0
        %2185 = vmatprep.subr.bf16.mxu0 0
        %2186 = vmatpush1.bf16.msra.mxu0 0
        %2187 = vmatprep.subr.bf16.mxu0 0
        %2188 = vmatpush1.bf16.msra.mxu0 0
        %2189 = vmatprep.subr.bf16.mxu0 0
        %2190 = vmatpush1.bf16.msra.mxu0 0
        %2191 = vmatprep.subr.bf16.mxu0 0
        %2192 = vmatpush1.bf16.msra.mxu0 0
        %2193 = vmatprep.subr.bf16.mxu0 0
        %2194 = vmatpush1.bf16.msra.mxu0 0
        %2195 = vmatprep.subr.bf16.mxu0 0
        %2196 = vmatpush1.bf16.msra.mxu0 0
        %2197 = vmatprep.subr.bf16.mxu0 0
        %2198 = vmatpush1.bf16.msra.mxu0 0
        %2199 = vmatprep.subr.bf16.mxu0 0
        %2200 = vmatpush1.bf16.msra.mxu0 0
        %2201 = vmatprep.mubr.bf16.mxu0 0
        %2202 = vmatmul.mubr.bf16.gmra.mrb[0].mxu0 %v2167
        %v2203 = vpop.f32.mrb[0].mxu0
        %v2204 = vadd.f32 %v2139, %v2203
        %v2205 = vpop.f32.mrb[0].mxu0
        %v2206 = vpop.f32.mrb[0].mxu0
        %v2207 = vadd.f32 %v2139, %v2206
        %v2208 = vpop.f32.mrb[0].mxu0
        %2209 = vdwg.mxu0
        %v2210 = vadd.f32 %v1995, %v2204
        %v2211 = vadd.f32 %v1996, %v2207
        %2212 = vst.msk [vmem:[#allocation2] sm:$0xff] %vm748, %v2210
        %2213 = vst.msk [vmem:[#allocation2 + $0x8] sm:$0xff] %vm748, %v2211
        %p2214 = scmp.eq.s32.totalorder %s32, 1
        // Predicated region
        $region101: #{tpu_custom_call.1} parent=83 // pred_check
          %p2215 = pneg %p2214
        $region102: #{tpu_custom_call.1} parent=83 // pred_check_branch
          %2217 = sbr.rel (%p2215) target = $region104
        $region103: #{tpu_custom_call.1} parent=83 // pred_region
          %v2218 = vld [vmem:[%s14] sm:$0x1]
          %v2219 = vld [vmem:[%s15] sm:$0x1]
          %v2220 = vsel %vm748, %v2210, 0.0
          %2221 = vadd.xlane.f32.xlu0 %v2220
          %v2222 = vpop.xlane.xlu0 %2221
          %v2223 = vsel %vm748, %v2211, 0.0
          %2224 = vadd.xlane.f32.xlu0 %v2223
          %v2225 = vpop.xlane.xlu0 %2224
          %v2226 = vmul.f32 %v2222, %v755
          %v2227 = vmul.f32 %v2225, %v755
          %v2228 = vsub.f32 %v2210, %v2226
          %v2229 = vsub.f32 %v2211, %v2227
          %v2230 = vmul.f32 %v2228, %v2228
          %v2231 = vmul.f32 %v2229, %v2229
          %v2232 = vsel %vm748, %v2230, 0.0
          %2233 = vadd.xlane.f32.xlu0 %v2232
          %v2234 = vpop.xlane.xlu0 %2233
          %v2235 = vsel %vm748, %v2231, 0.0
          %2236 = vadd.xlane.f32.xlu0 %v2235
          %v2237 = vpop.xlane.xlu0 %2236
          %v2238 = vmul.f32 %v2234, 0.032258064
          %v2239 = vmul.f32 %v2237, 0.032258064
          %v2241 = vlaneseq
          %v2242 = vshrl.u32 %v2241, 7
          %v2243 = vsub.s32 0, %v2242
          %v2244 = vrot.slane %v2218, %v2243
          %v2246 = vmul.f32 %v2244, %v2228
          %v2247 = vmul.f32 %v2244, %v2229
          %v2248 = vrsqrt.pop %v2238
          %v2249 = vmul.f32 %v2238, %v2248
          %vm2250 = vcmp.eq.f32.partialorder %v2238, inf
          %v2251 = vsel %vm2250, %v2238, %v2249
          %vm2252 = vcmp.eq.f32.partialorder %v2238, 0.0
          %v2253 = vand.u32 %v2238, 2147483648
          %v2254 = vsel %vm2252, %v2253, %v2251
          %v2255 = vrsqrt.pop %v2239
          %v2256 = vmul.f32 %v2239, %v2255
          %vm2257 = vcmp.eq.f32.partialorder %v2239, inf
          %v2258 = vsel %vm2257, %v2239, %v2256
          %vm2259 = vcmp.eq.f32.partialorder %v2239, 0.0
          %v2260 = vand.u32 %v2239, 2147483648
          %v2261 = vsel %vm2259, %v2260, %v2258
          %v2262 = vadd.f32 %v2254, 1e-06
          %v2263 = vadd.f32 %v2261, 1e-06
          %v2264 = vrcp.pop %v2262
          %v2265 = vmul.f32 %v2246, %v2264
          %v2266 = vrcp.pop %v2263
          %v2267 = vmul.f32 %v2247, %v2266
          %v2269 = vlaneseq
          %v2270 = vshrl.u32 %v2269, 7
          %v2271 = vsub.s32 0, %v2270
          %v2272 = vrot.slane %v2219, %v2271
          %v2274 = vadd.f32 %v2265, %v2272
          %v2275 = vadd.f32 %v2267, %v2272
          %2276 = vst.msk [vmem:[#allocation9] sm:$0xff] %vm748, %v2274
          %2277 = vst.msk [vmem:[#allocation9 + $0x8] sm:$0xff] %vm748, %v2275
        $region104: #{tpu_custom_call.1} parent=83 // pred_fallthru
          _
        // Predicated region
        $region105: #{tpu_custom_call.1} parent=83 // pred_check
          %p2278 = pneg %p441
        $region106: #{tpu_custom_call.1} parent=83 // pred_check_branch
          %2280 = sbr.rel (%p2278) target = $region108
        $region107: #{tpu_custom_call.1} parent=83 // pred_region
          %s2282 = ssub.s32 256, 256
          %2283 = vsyncadd [#allocation5], %s2282
          %s2284 = sshll.u32 [#allocation9], 4
          %s2285 = int_to_ptr.vmem [resolvable:$true] %s2284
          %2290 = dma.vmem_to_hbm [thread:$0]  %s2285, 256, %s16, [#allocation5], 128, 128, 8
        $region108: #{tpu_custom_call.1} parent=83 // pred_fallthru
          _
        // Predicated region
        $region109: #{tpu_custom_call.1} parent=83 // pred_check
          %p2291 = pneg %p441
        $region110: #{tpu_custom_call.1} parent=83 // pred_check_branch
          %2293 = sbr.rel (%p2291) target = $region112
        $region111: #{tpu_custom_call.1} parent=83 // pred_region
          %2294 = dma.done [#allocation5], 256
        $region112: #{tpu_custom_call.1} parent=83 // pred_fallthru
          _
      $region84: #{tpu_custom_call.1} parent=5 // pred_fallthru
        _
      %p2295 = scmp.le.s32.totalorder 2, %s27
      // Predicated region
      $region113: #{tpu_custom_call.1} parent=5 // pred_check
        %p2296 = pneg %p2295
      $region114: #{tpu_custom_call.1} parent=5 // pred_check_branch
        %2298 = sbr.rel (%p2296) target = $region116
      $region115: #{tpu_custom_call.1} parent=5 // pred_region
        %s2299 = ssub.s32 %s27, 2
      $region116: #{tpu_custom_call.1} parent=5 // pred_fallthru
        _
    $region6: #{tpu_custom_call.1} parent=1 // loop_footer
      %s31 = sadd.s32 1, %s27
    $region7: #{tpu_custom_call.1} parent=1 // loop_footer_branch
      %26 = sbr.rel target = $region3
    $region8: #{tpu_custom_call.1} parent=1 // loop_exit
      _
    %2300 = vsyncpa [#allocation4], 1
    %s2301 = scalar_lea.sflag [#allocation4], 1
    %2302 = vsyncpa %s2301, 1
    %2303 = vsyncpa [#allocation7], 1
    %s2304 = scalar_lea.sflag [#allocation7], 1
    %2305 = vsyncpa %s2304, 1
    %2306 = vsyncpa [#allocation5], 1
    %s2307 = scalar_lea.sflag [#allocation5], 1
    %2308 = vsyncpa %s2307, 1

</llo_original>
